<compile_context>
chip_gen: v7x
topology: tpu7x:2x2x1
jax: 0.10.0
libtpu: 0.0.40
codegen_flags: <defaults>
</compile_context>

<pallas_src>
import functools

import jax
import jax.numpy as jnp
from jax import lax
from jax.experimental import pallas as pl
from jax.experimental.pallas import tpu as pltpu


VMEM_LIMIT = 32 * 1024 * 1024       # explicit scoped-VMEM request (<= physical
                                    # on every generation incl. v7x)
MM_VMEM_BUDGET = 12 * 1024 * 1024   # target working set for matmul tiles


def _round_up(x, m):
    return (x + m - 1) // m * m


# ----------------------------------------------------------------------------
# Fused Pallas matmul kernel:  out = [relu]( (A [- A2]) @ B + bias )
#   A/A2: (M, K) bf16   B: (K, N) bf16   bias: (1, N) f32
# ----------------------------------------------------------------------------
def _mm_kernel(*refs, relu, has_a2, multi_k):
    i = 0
    a_ref = refs[i]; i += 1
    a2_ref = None
    if has_a2:
        a2_ref = refs[i]; i += 1
    b_ref = refs[i]; i += 1
    bias_ref = refs[i]; i += 1
    o_ref = refs[i]; i += 1
    acc_ref = refs[i] if multi_k else None

    a = a_ref[...]
    if has_a2:
        a = a - a2_ref[...]                       # fused `ref - dis`
    part = jnp.dot(a, b_ref[...], preferred_element_type=jnp.float32)

    def epilogue(acc):
        out = acc + bias_ref[...]
        if relu:
            out = jnp.maximum(out, 0.0)
        return out.astype(o_ref.dtype)

    if multi_k:
        @pl.when(pl.program_id(2) == 0)
        def _():
            acc_ref[...] = jnp.zeros_like(acc_ref)

        acc_ref[...] += part

        @pl.when(pl.program_id(2) == pl.num_programs(2) - 1)
        def _():
            o_ref[...] = epilogue(acc_ref[...])
    else:
        o_ref[...] = epilogue(part)


def pallas_matmul(a, w, bias, *, a2=None, relu=False, out_dtype=jnp.bfloat16):
    """a/a2: (M, Ka<=Kp), w: (Kp, N) bf16 with Kp % 128 == 0, bias: (N,)|(1,N)."""
    M, Ka = a.shape
    Kp, N = w.shape
    assert Ka <= Kp and Kp % 128 == 0

    a = a.astype(jnp.bfloat16)
    if a2 is not None:
        a2 = a2.astype(jnp.bfloat16)
    w = w.astype(jnp.bfloat16)
    bias = bias.astype(jnp.float32).reshape(1, N)

    # ---- tile selection (every block stays (8,128)-legal) ----
    if M <= 1024:
        TM = _round_up(M, 16)                 # bf16-sublane-aligned
    else:
        TM = next((t for t in (512, 256, 128) if M % t == 0), 256)
    Mp = _round_up(M, TM)
    TN = N if N <= 512 else next((t for t in (512, 256, 128) if N % t == 0), 128)
    Np = _round_up(N, TN)
    # keep >=2 (M,N) blocks so both v7x TensorCores are used when possible
    if (Mp // TM) * (Np // TN) < 2:
        if Np >= 256 and (Np // 2) % 128 == 0:
            TN = Np // 2
        elif TM >= 32:
            TM = _round_up(TM // 2, 16)
            Mp = _round_up(M, TM)

    n_a = 2 if a2 is not None else 1

    def footprint(tk):                         # double-buffered working set
        return (2 * 2 * TM * tk * n_a + 2 * 2 * tk * TN
                + 2 * 2 * TM * TN + 4 * TM * TN + 2 * 4 * TN)

    cand = [Kp] + [t for t in (8192, 4096, 2048, 1024, 512, 256, 128)
                   if Kp % t == 0 and t < Kp]
    TK = next((t for t in cand if footprint(t) <= MM_VMEM_BUDGET), 128)

    if (Mp, Kp) != (M, Ka):
        a = jnp.pad(a, ((0, Mp - M), (0, Kp - Ka)))
        if a2 is not None:
            a2 = jnp.pad(a2, ((0, Mp - M), (0, Kp - Ka)))
    if Np != N:
        w = jnp.pad(w, ((0, 0), (0, Np - N)))
        bias = jnp.pad(bias, ((0, 0), (0, Np - N)))

    operands = [a]
    in_specs = [pl.BlockSpec((TM, TK), lambda i, j, k: (i, k))]
    if a2 is not None:
        operands.append(a2)
        in_specs.append(pl.BlockSpec((TM, TK), lambda i, j, k: (i, k)))
    operands += [w, bias]
    in_specs += [pl.BlockSpec((TK, TN), lambda i, j, k: (k, j)),
                 pl.BlockSpec((1, TN), lambda i, j, k: (0, j))]

    nk = Kp // TK
    multi_k = nk > 1
    scratch = [pltpu.VMEM((TM, TN), jnp.float32)] if multi_k else []

    out = pl.pallas_call(
        functools.partial(_mm_kernel, relu=relu, has_a2=a2 is not None,
                          multi_k=multi_k),
        out_shape=jax.ShapeDtypeStruct((Mp, Np), out_dtype),
        grid_spec=pltpu.PrefetchScalarGridSpec(
            num_scalar_prefetch=0,
            grid=(Mp // TM, Np // TN, nk),
            in_specs=in_specs,
            out_specs=pl.BlockSpec((TM, TN), lambda i, j, k: (i, j)),
            scratch_shapes=scratch,
        ),
        compiler_params=pltpu.CompilerParams(
            dimension_semantics=("parallel", "parallel", "arbitrary"),
            vmem_limit_bytes=VMEM_LIMIT),
    )(*operands)

    if (Mp, Np) != (M, N):
        out = out[:M, :N]
    return out


# ----------------------------------------------------------------------------
# 3x3 stride-1 pad-1 conv: per-sample kernel, 9 shifted GEMMs, no im2col.
# Activation is passed as a W+H zero-padded NHWC tensor flattened to
# (Hp*Wp, C); every tap is a contiguous static row-slice of that block.
# ----------------------------------------------------------------------------
def _conv3x3_kernel(*refs, wp, relu, has_res):
    if has_res:
        x_ref, w_ref, b_ref, r_ref, o_ref = refs
    else:
        x_ref, w_ref, b_ref, o_ref = refs
        r_ref = None
    L = o_ref.shape[1]
    acc = None
    for di in range(3):
        for dj in range(3):
            t = di * 3 + dj
            lhs = x_ref[0, pl.ds(di * wp + dj, L), :]
            part = jnp.dot(lhs, w_ref[t], preferred_element_type=jnp.float32)
            acc = part if acc is None else acc + part
    acc = acc + b_ref[...]
    if has_res:
        acc = acc + r_ref[0].astype(jnp.float32)
    if relu:
        acc = jnp.maximum(acc, 0.0)
    o_ref[0] = acc.astype(o_ref.dtype)


def conv3x3_s1(x, w_taps, bias, *, relu=True, residual=None):
    """x: (N,H,W,C) NHWC bf16; w_taps: (9,C,Cout) bf16 (BN folded); bias: (Cout,)."""
    n, oh, ow, c = x.shape
    cout = w_taps.shape[2]
    wp = ow + 2
    hp = oh + 3                        # 1 top + 2 bottom zero rows keep all 9
    L = oh * wp                        # shifted windows in-bounds
    x = x.astype(jnp.bfloat16)
    x_flat = jnp.pad(x, ((0, 0), (1, 2), (1, 1), (0, 0))).reshape(n, hp * wp, c)
    bias = bias.astype(jnp.float32).reshape(1, cout)

    operands = [x_flat, w_taps, bias]
    in_specs = [pl.BlockSpec((1, hp * wp, c), lambda b: (b, 0, 0)),
                pl.BlockSpec((9, c, cout), lambda b: (0, 0, 0)),
                pl.BlockSpec((1, cout), lambda b: (0, 0))]
    has_res = residual is not None
    if has_res:
        r = jnp.pad(residual.astype(jnp.bfloat16),
                    ((0, 0), (0, 0), (0, 2), (0, 0))).reshape(n, L, cout)
        operands.append(r)
        in_specs.append(pl.BlockSpec((1, L, cout), lambda b: (b, 0, 0)))

    out_flat = pl.pallas_call(
        functools.partial(_conv3x3_kernel, wp=wp, relu=relu, has_res=has_res),
        out_shape=jax.ShapeDtypeStruct((n, L, cout), jnp.bfloat16),
        grid_spec=pltpu.PrefetchScalarGridSpec(
            num_scalar_prefetch=0,
            grid=(n,),
            in_specs=in_specs,
            out_specs=pl.BlockSpec((1, L, cout), lambda b: (b, 0, 0)),
        ),
        compiler_params=pltpu.CompilerParams(
            dimension_semantics=("parallel",),
            vmem_limit_bytes=VMEM_LIMIT),
    )(*operands)
    # strip the two junk columns of each row group (the W-halo positions)
    return out_flat.reshape(n, oh, wp, cout)[:, :, :ow, :]


# ----------------------------------------------------------------------------
# Batched bilinear pool kernel:  out[b] = X_b^T @ X_b / hw  (no HBM transpose)
# ----------------------------------------------------------------------------
def _bilinear_kernel(x_ref, o_ref, *, inv_hw):
    x = x_ref[0]                                          # (hw, c)
    g = lax.dot_general(x, x, dimension_numbers=(((0,), (0,)), ((), ())),
                        preferred_element_type=jnp.float32)
    o_ref[0] = (g * inv_hw).astype(o_ref.dtype)


def bilinear_flat(red2d, n, hw):
    """red2d: (n*hw, C) NHWC-flattened -> (n, C*C) bf16."""
    c = red2d.shape[1]
    x = red2d.astype(jnp.bfloat16).reshape(n, hw, c)
    out = pl.pallas_call(
        functools.partial(_bilinear_kernel, inv_hw=1.0 / hw),
        out_shape=jax.ShapeDtypeStruct((n, c, c), jnp.bfloat16),
        grid_spec=pltpu.PrefetchScalarGridSpec(
            num_scalar_prefetch=0,
            grid=(n,),
            in_specs=[pl.BlockSpec((1, hw, c), lambda b: (b, 0, 0))],
            out_specs=pl.BlockSpec((1, c, c), lambda b: (b, 0, 0)),
        ),
        compiler_params=pltpu.CompilerParams(
            dimension_semantics=("parallel",),
            vmem_limit_bytes=VMEM_LIMIT),
    )(x)
    return out.reshape(n, c * c)


# ----------------------------------------------------------------------------
# im2col conv (7x7 stem, the three stride-2 3x3 conv1s, 1x1 downsamples)
# ----------------------------------------------------------------------------
def _im2col_nhwc(x, kh, kw, stride, pad, k_total):
    if pad:
        x = jnp.pad(x, ((0, 0), (pad, pad), (pad, pad), (0, 0)))
    n, h, w, c = x.shape
    oh = (h - kh) // stride + 1
    ow = (w - kw) // stride + 1
    cols = []
    for i in range(kh):
        for j in range(kw):
            cols.append(x[:, i:i + stride * oh:stride,
                          j:j + stride * ow:stride, :])
    kdim = kh * kw * c
    if k_total > kdim:
        cols.append(jnp.zeros((n, oh, ow, k_total - kdim), x.dtype))
    patches = jnp.concatenate(cols, axis=-1)
    return patches.reshape(n * oh * ow, patches.shape[-1]), oh, ow


def conv_im2col(x, w_mat, bias, *, kh, kw, stride, pad, relu):
    n = x.shape[0]
    cout = w_mat.shape[1]
    if kh == 1 and kw == 1:
        if stride > 1:
            x = x[:, ::stride, ::stride, :]
        _, oh, ow, cin = x.shape
        patches = x.reshape(n * oh * ow, cin)
    else:
        patches, oh, ow = _im2col_nhwc(x, kh, kw, stride, pad, w_mat.shape[0])
    out = pallas_matmul(patches, w_mat, bias, relu=relu)
    return out.reshape(n, oh, ow, cout)


def maxpool3x3s2(x):
    init = jnp.array(-jnp.inf, dtype=x.dtype)
    return lax.reduce_window(x, init, lax.max,
                             (1, 3, 3, 1), (1, 2, 2, 1),
                             [(0, 0), (1, 1), (1, 1), (0, 0)])


# ----------------------------------------------------------------------------
# ResNet34 feature extractor (BN folded, NHWC bf16)
# ----------------------------------------------------------------------------
def basic_block(x, blk):
    stride1 = blk['w1'].ndim == 3            # tap layout <=> stride-1 conv
    if stride1:
        out1 = conv3x3_s1(x, blk['w1'], blk['b1'], relu=True)
        stride = 1
    else:
        stride = 2
        out1 = conv_im2col(x, blk['w1'], blk['b1'], kh=3, kw=3, stride=2,
                           pad=1, relu=True)
    if 'wd' in blk:
        ident = conv_im2col(x, blk['wd'], blk['bd'], kh=1, kw=1,
                            stride=stride, pad=0, relu=False)
    else:
        ident = x
    # conv2 + folded BN2 + residual add + ReLU, all in one kernel epilogue
    return conv3x3_s1(out1, blk['w2'], blk['b2'], relu=True, residual=ident)


def resnet_features(prep, x_nchw):
    x = jnp.transpose(x_nchw, (0, 2, 3, 1)).astype(jnp.bfloat16)
    x = conv_im2col(x, prep['stem_w'], prep['stem_b'], kh=7, kw=7, stride=2,
                    pad=3, relu=True)
    x = maxpool3x3s2(x)
    feats = []
    for blocks in prep['layers']:
        for blk in blocks:
            x = basic_block(x, blk)
        feats.append(x)
    return tuple(feats)


# ----------------------------------------------------------------------------
# IQA head
# ----------------------------------------------------------------------------
def quality_assessment(prep, dis, ref_feats):
    dis_feats = resnet_features(prep, dis)
    parts = []
    for i, (r, d) in enumerate(zip(ref_feats, dis_feats)):
        n, h, w, cin = r.shape
        # measure_distnace fused into channel_reduction: (r - d) @ W1x1 + b
        red = pallas_matmul(r.reshape(n * h * w, cin),
                            prep['red'][i]['w'], prep['red'][i]['b'],
                            a2=d.reshape(n * h * w, cin))
        parts.append(bilinear_flat(red, n, h * w))
    features = jnp.concatenate(parts, axis=1)                 # (n, 36864) bf16

    # fc1_score & fc1_weight fused into one 36864 -> 1024 matmul (+ ReLU)
    h_all = pallas_matmul(features, prep['fc1_w'], prep['fc1_b'], relu=True)
    # fc2_score & fc2_weight fused into one block-diagonal 1024 -> 2 matmul
    ms = pallas_matmul(h_all, prep['fc2_w'], prep['fc2_b'],
                       out_dtype=jnp.float32)
    mean = ms[:, 0:1]
    sigma = jnp.logaddexp(0.0, ms[:, 1:2])                    # softplus
    return mean, sigma


def forward(prep, ref, dis_a, dis_b):
    ref_feats = resnet_features(prep, ref)
    mean_a, sigma_a = quality_assessment(prep, dis_a, ref_feats)
    mean_b, sigma_b = quality_assessment(prep, dis_b, ref_feats)
    mean_diff = mean_a - mean_b
    y_var = sigma_a * sigma_a + sigma_b * sigma_b + 1e-8
    # TODO(synk): final erf acts on a (B,1) tensor; kept in plain JAX.
    return 0.5 * (1.0 + lax.erf(mean_diff / jnp.sqrt(2.0 * y_var)))


# ----------------------------------------------------------------------------
# Deterministic parameter construction + one-time kernel-layout preparation
# ----------------------------------------------------------------------------
class _Init:
    def __init__(self, key):
        self.key = key

    def normal(self, shape, std):
        self.key, sub = jax.random.split(self.key)
        return jax.random.normal(sub, shape, jnp.float32) * std


def _conv_w(init, cout, cin, k):
    return init.normal((cout, cin, k, k), (2.0 / (cin * k * k)) ** 0.5)


def _bn(c):
    return (jnp.ones((c,), jnp.float32), jnp.zeros((c,), jnp.float32),
            jnp.zeros((c,), jnp.float32), jnp.ones((c,), jnp.float32))


_RESNET34_CFG = [(64, 3), (128, 4), (256, 6), (512, 3)]


def make_params(init):
    rp = {'conv1': _conv_w(init, 64, 3, 7), 'bn1': _bn(64)}
    in_c = 64
    layers = []
    for out_c, nblocks in _RESNET34_CFG:
        blocks = []
        for bi in range(nblocks):
            s = (1 if out_c == 64 else 2) if bi == 0 else 1
            blk = {'conv1': _conv_w(init, out_c, in_c, 3), 'bn1': _bn(out_c),
                   'conv2': _conv_w(init, out_c, out_c, 3), 'bn2': _bn(out_c)}
            if s != 1 or in_c != out_c:
                blk['down'] = _conv_w(init, out_c, in_c, 1)
                blk['down_bn'] = _bn(out_c)
            blocks.append(blk)
            in_c = out_c
        layers.append(blocks)
    rp['layers'] = layers

    p = {'resnet': rp, 'red_w': [], 'red_b': []}
    for cin in (64, 128, 256, 512):                 # conv_layer_1..4: 1x1 -> 96
        p['red_w'].append(init.normal((96, cin, 1, 1), (2.0 / cin) ** 0.5))
        p['red_b'].append(init.normal((96,), 0.01))
    for name, (din, dout) in [('fc1_score', (36864, 512)),
                              ('fc2_score', (512, 1)),
                              ('fc1_weight', (36864, 512)),
                              ('fc2_weight', (512, 1))]:
        std = (1.0 / din) ** 0.5
        p[name + '_w'] = init.normal((dout, din), std)
        p[name + '_b'] = init.normal((dout,), std)
    return p


def _fold_bn(w_oihw, bn, eps=1e-5):
    gamma, beta, mean, var = bn
    scale = gamma / jnp.sqrt(var + eps)
    return w_oihw * scale[:, None, None, None], beta - mean * scale


def _mm_weight(w_oihw):
    """(cout,cin,kh,kw) -> bf16 (round_up(kh*kw*cin,128), cout) im2col layout."""
    cout, cin, kh, kw = w_oihw.shape
    wm = jnp.transpose(w_oihw, (2, 3, 1, 0)).reshape(kh * kw * cin, cout)
    kp = _round_up(kh * kw * cin, 128)
    if kp != wm.shape[0]:
        wm = jnp.pad(wm, ((0, kp - wm.shape[0]), (0, 0)))
    return wm.astype(jnp.bfloat16)


def _tap_weight(w_oihw):
    """(cout,cin,3,3) -> bf16 (9, cin, cout) tap layout for conv3x3_s1."""
    cout, cin, kh, kw = w_oihw.shape
    w = jnp.transpose(w_oihw, (2, 3, 1, 0)).reshape(kh * kw, cin, cout)
    return w.astype(jnp.bfloat16)


def prepare_params(p):
    """One-time: fold BN, pre-layout/pad/cast weights to bf16, fuse FC heads."""
    rp = p['resnet']
    w, b = _fold_bn(rp['conv1'], rp['bn1'])
    prep = {'stem_w': _mm_weight(w), 'stem_b': b.reshape(1, -1)}
    layers = []
    for (out_c, _), blocks in zip(_RESNET34_CFG, rp['layers']):
        nblocks = []
        for bi, blk in enumerate(blocks):
            stride = (1 if out_c == 64 else 2) if bi == 0 else 1
            nb = {}
            w1, b1 = _fold_bn(blk['conv1'], blk['bn1'])
            w2, b2 = _fold_bn(blk['conv2'], blk['bn2'])
            nb['w1'] = _tap_weight(w1) if stride == 1 else _mm_weight(w1)
            nb['b1'] = b1.reshape(1, -1)
            nb['w2'] = _tap_weight(w2)             # conv2 is always stride 1
            nb['b2'] = b2.reshape(1, -1)
            if 'down' in blk:
                wd, bd = _fold_bn(blk['down'], blk['down_bn'])
                nb['wd'], nb['bd'] = _mm_weight(wd), bd.reshape(1, -1)
            nblocks.append(nb)
        layers.append(nblocks)
    prep['layers'] = layers
    prep['red'] = [{'w': _mm_weight(p['red_w'][i]),
                    'b': p['red_b'][i].reshape(1, -1)} for i in range(4)]
    # fused fc1: (36864, 1024); first 512 outputs = score head, last 512 = weight
    w1 = jnp.concatenate([p['fc1_score_w'], p['fc1_weight_w']], axis=0)
    prep['fc1_w'] = jnp.transpose(w1).astype(jnp.bfloat16)
    prep['fc1_b'] = jnp.concatenate([p['fc1_score_b'],
                                     p['fc1_weight_b']]).reshape(1, -1)
    # fused block-diagonal fc2: (1024, 2)
    w2 = jnp.zeros((1024, 2), jnp.float32)
    w2 = w2.at[:512, 0].set(p['fc2_score_w'][0])
    w2 = w2.at[512:, 1].set(p['fc2_weight_w'][0])
    prep['fc2_w'] = w2.astype(jnp.bfloat16)
    prep['fc2_b'] = jnp.stack([p['fc2_score_b'][0],
                               p['fc2_weight_b'][0]]).reshape(1, 2)
    return prep


# ----------------------------------------------------------------------------
# small numerical self-test of the new in-kernel 3x3 conv (vs XLA conv)
# ----------------------------------------------------------------------------
def _selftest_conv3x3():
    kx, kw, kb = jax.random.split(jax.random.PRNGKey(123), 3)
    x = jax.random.normal(kx, (2, 5, 6, 16), jnp.float32).astype(jnp.bfloat16)
    w = jax.random.normal(kw, (24, 16, 3, 3), jnp.float32) * 0.1     # OIHW
    b = jax.random.normal(kb, (24,), jnp.float32) * 0.1
    res = jax.random.normal(kb, (2, 5, 6, 24), jnp.float32).astype(jnp.bfloat16)
    out = conv3x3_s1(x, _tap_weight(w), b, relu=True, residual=res)
    ref = lax.conv_general_dilated(
        x.astype(jnp.float32), jnp.transpose(w, (2, 3, 1, 0)),
        window_strides=(1, 1), padding=((1, 1), (1, 1)),
        dimension_numbers=('NHWC', 'HWIO', 'NHWC'))
    ref = jnp.maximum(ref + b + res.astype(jnp.float32), 0.0)
    err = float(jnp.max(jnp.abs(out.astype(jnp.float32) - ref)))
    assert err < 0.1, err


# ----------------------------------------------------------------------------
if __name__ == "__main__":
    _selftest_conv3x3()

    B, H, W = 2, 64, 64   # small input; the 36864 head dim (= 4*96*96) is
                          # architecture-fixed and independent of H, W.
    root = jax.random.PRNGKey(0)
    pkey, dkey = jax.random.split(root)
    params = make_params(_Init(pkey))
    prep = jax.block_until_ready(jax.jit(prepare_params)(params))

    kr, ka, kb = jax.random.split(dkey, 3)
    ref = jax.random.normal(kr, (B, 3, H, W), jnp.float32)
    dis_a = jax.random.normal(ka, (B, 3, H, W), jnp.float32)
    dis_b = jax.random.normal(kb, (B, 3, H, W), jnp.float32)

    out = jax.block_until_ready(jax.jit(forward)(prep, ref, dis_a, dis_b))

    assert out.shape == (B, 1), out.shape
    assert bool(jnp.all(jnp.isfinite(out)))
    print("KERNEL_OK")
</pallas_src>

<mosaic_0001>
module attributes {stable_mosaic.version = 11 : i64} {
  func.func @_conv3x3_kernel(%arg0: i32, %arg1: memref<1x64x16xbf16, #tpu.memory_space<vmem>>, %arg2: memref<9x16x24xbf16, #tpu.memory_space<vmem>>, %arg3: memref<1x24xf32, #tpu.memory_space<vmem>>, %arg4: memref<1x40x24xbf16, #tpu.memory_space<vmem>>, %arg5: memref<1x40x24xbf16, #tpu.memory_space<vmem>>) attributes {dimension_semantics = [#tpu.dimension_semantics<parallel>], iteration_bounds = array<i64: 2>, scalar_prefetch = 0 : i64, scratch_operands = 0 : i64, tpu.core_type = #tpu.core_type<tc>, window_params = [{transform_indices = @transform_0, window_bounds = array<i64: 1, 64, 16>}, {pipeline_mode = #tpu.pipeline_mode<synchronous>, transform_indices = @transform_1, window_bounds = array<i64: 9, 16, 24>}, {pipeline_mode = #tpu.pipeline_mode<synchronous>, transform_indices = @transform_2, window_bounds = array<i64: 1, 24>}, {transform_indices = @transform_3, window_bounds = array<i64: 1, 40, 24>}, {transform_indices = @transform_4, window_bounds = array<i64: 1, 40, 24>}]} {
    %c0 = arith.constant 0 : index
    %c0_0 = arith.constant 0 : index
    %c0_1 = arith.constant 0 : index
    %0 = vector.load %arg1[%c0, %c0_0, %c0_1] : memref<1x64x16xbf16, #tpu.memory_space<vmem>>, vector<1x40x16xbf16>
    %1 = vector.shape_cast %0 : vector<1x40x16xbf16> to vector<40x16xbf16>
    %c0_2 = arith.constant 0 : index
    %c0_3 = arith.constant 0 : index
    %c0_4 = arith.constant 0 : index
    %2 = vector.load %arg2[%c0_2, %c0_3, %c0_4] : memref<9x16x24xbf16, #tpu.memory_space<vmem>>, vector<1x16x24xbf16>
    %3 = vector.shape_cast %2 : vector<1x16x24xbf16> to vector<16x24xbf16>
    %cst = arith.constant dense<0.000000e+00> : vector<40x24xf32>
    %4 = tpu.matmul %1, %3, %cst {dimension_numbers = #tpu.dot_dimension_numbers<[1], [0], [0], [1], [0, 0, 1, 1], [], []>} : vector<40x16xbf16>, vector<16x24xbf16>, vector<40x24xf32> -> vector<40x24xf32>
    %c0_5 = arith.constant 0 : index
    %c1 = arith.constant 1 : index
    %c0_6 = arith.constant 0 : index
    %5 = vector.load %arg1[%c0_5, %c1, %c0_6] : memref<1x64x16xbf16, #tpu.memory_space<vmem>>, vector<1x40x16xbf16>
    %6 = vector.shape_cast %5 : vector<1x40x16xbf16> to vector<40x16xbf16>
    %c1_7 = arith.constant 1 : index
    %c0_8 = arith.constant 0 : index
    %c0_9 = arith.constant 0 : index
    %7 = vector.load %arg2[%c1_7, %c0_8, %c0_9] : memref<9x16x24xbf16, #tpu.memory_space<vmem>>, vector<1x16x24xbf16>
    %8 = vector.shape_cast %7 : vector<1x16x24xbf16> to vector<16x24xbf16>
    %cst_10 = arith.constant dense<0.000000e+00> : vector<40x24xf32>
    %9 = tpu.matmul %6, %8, %cst_10 {dimension_numbers = #tpu.dot_dimension_numbers<[1], [0], [0], [1], [0, 0, 1, 1], [], []>} : vector<40x16xbf16>, vector<16x24xbf16>, vector<40x24xf32> -> vector<40x24xf32>
    %10 = arith.addf %4, %9 : vector<40x24xf32>
    %c0_11 = arith.constant 0 : index
    %c2 = arith.constant 2 : index
    %c0_12 = arith.constant 0 : index
    %11 = vector.load %arg1[%c0_11, %c2, %c0_12] : memref<1x64x16xbf16, #tpu.memory_space<vmem>>, vector<1x40x16xbf16>
    %12 = vector.shape_cast %11 : vector<1x40x16xbf16> to vector<40x16xbf16>
    %c2_13 = arith.constant 2 : index
    %c0_14 = arith.constant 0 : index
    %c0_15 = arith.constant 0 : index
    %13 = vector.load %arg2[%c2_13, %c0_14, %c0_15] : memref<9x16x24xbf16, #tpu.memory_space<vmem>>, vector<1x16x24xbf16>
    %14 = vector.shape_cast %13 : vector<1x16x24xbf16> to vector<16x24xbf16>
    %cst_16 = arith.constant dense<0.000000e+00> : vector<40x24xf32>
    %15 = tpu.matmul %12, %14, %cst_16 {dimension_numbers = #tpu.dot_dimension_numbers<[1], [0], [0], [1], [0, 0, 1, 1], [], []>} : vector<40x16xbf16>, vector<16x24xbf16>, vector<40x24xf32> -> vector<40x24xf32>
    %16 = arith.addf %10, %15 : vector<40x24xf32>
    %c0_17 = arith.constant 0 : index
    %c8 = arith.constant 8 : index
    %c0_18 = arith.constant 0 : index
    %17 = vector.load %arg1[%c0_17, %c8, %c0_18] : memref<1x64x16xbf16, #tpu.memory_space<vmem>>, vector<1x40x16xbf16>
    %18 = vector.shape_cast %17 : vector<1x40x16xbf16> to vector<40x16xbf16>
    %c3 = arith.constant 3 : index
    %c0_19 = arith.constant 0 : index
    %c0_20 = arith.constant 0 : index
    %19 = vector.load %arg2[%c3, %c0_19, %c0_20] : memref<9x16x24xbf16, #tpu.memory_space<vmem>>, vector<1x16x24xbf16>
    %20 = vector.shape_cast %19 : vector<1x16x24xbf16> to vector<16x24xbf16>
    %cst_21 = arith.constant dense<0.000000e+00> : vector<40x24xf32>
    %21 = tpu.matmul %18, %20, %cst_21 {dimension_numbers = #tpu.dot_dimension_numbers<[1], [0], [0], [1], [0, 0, 1, 1], [], []>} : vector<40x16xbf16>, vector<16x24xbf16>, vector<40x24xf32> -> vector<40x24xf32>
    %22 = arith.addf %16, %21 : vector<40x24xf32>
    %c0_22 = arith.constant 0 : index
    %c9 = arith.constant 9 : index
    %c0_23 = arith.constant 0 : index
    %23 = vector.load %arg1[%c0_22, %c9, %c0_23] : memref<1x64x16xbf16, #tpu.memory_space<vmem>>, vector<1x40x16xbf16>
    %24 = vector.shape_cast %23 : vector<1x40x16xbf16> to vector<40x16xbf16>
    %c4 = arith.constant 4 : index
    %c0_24 = arith.constant 0 : index
    %c0_25 = arith.constant 0 : index
    %25 = vector.load %arg2[%c4, %c0_24, %c0_25] : memref<9x16x24xbf16, #tpu.memory_space<vmem>>, vector<1x16x24xbf16>
    %26 = vector.shape_cast %25 : vector<1x16x24xbf16> to vector<16x24xbf16>
    %cst_26 = arith.constant dense<0.000000e+00> : vector<40x24xf32>
    %27 = tpu.matmul %24, %26, %cst_26 {dimension_numbers = #tpu.dot_dimension_numbers<[1], [0], [0], [1], [0, 0, 1, 1], [], []>} : vector<40x16xbf16>, vector<16x24xbf16>, vector<40x24xf32> -> vector<40x24xf32>
    %28 = arith.addf %22, %27 : vector<40x24xf32>
    %c0_27 = arith.constant 0 : index
    %c10 = arith.constant 10 : index
    %c0_28 = arith.constant 0 : index
    %29 = vector.load %arg1[%c0_27, %c10, %c0_28] : memref<1x64x16xbf16, #tpu.memory_space<vmem>>, vector<1x40x16xbf16>
    %30 = vector.shape_cast %29 : vector<1x40x16xbf16> to vector<40x16xbf16>
    %c5 = arith.constant 5 : index
    %c0_29 = arith.constant 0 : index
    %c0_30 = arith.constant 0 : index
    %31 = vector.load %arg2[%c5, %c0_29, %c0_30] : memref<9x16x24xbf16, #tpu.memory_space<vmem>>, vector<1x16x24xbf16>
    %32 = vector.shape_cast %31 : vector<1x16x24xbf16> to vector<16x24xbf16>
    %cst_31 = arith.constant dense<0.000000e+00> : vector<40x24xf32>
    %33 = tpu.matmul %30, %32, %cst_31 {dimension_numbers = #tpu.dot_dimension_numbers<[1], [0], [0], [1], [0, 0, 1, 1], [], []>} : vector<40x16xbf16>, vector<16x24xbf16>, vector<40x24xf32> -> vector<40x24xf32>
    %34 = arith.addf %28, %33 : vector<40x24xf32>
    %c0_32 = arith.constant 0 : index
    %c16 = arith.constant 16 : index
    %c0_33 = arith.constant 0 : index
    %35 = vector.load %arg1[%c0_32, %c16, %c0_33] : memref<1x64x16xbf16, #tpu.memory_space<vmem>>, vector<1x40x16xbf16>
    %36 = vector.shape_cast %35 : vector<1x40x16xbf16> to vector<40x16xbf16>
    %c6 = arith.constant 6 : index
    %c0_34 = arith.constant 0 : index
    %c0_35 = arith.constant 0 : index
    %37 = vector.load %arg2[%c6, %c0_34, %c0_35] : memref<9x16x24xbf16, #tpu.memory_space<vmem>>, vector<1x16x24xbf16>
    %38 = vector.shape_cast %37 : vector<1x16x24xbf16> to vector<16x24xbf16>
    %cst_36 = arith.constant dense<0.000000e+00> : vector<40x24xf32>
    %39 = tpu.matmul %36, %38, %cst_36 {dimension_numbers = #tpu.dot_dimension_numbers<[1], [0], [0], [1], [0, 0, 1, 1], [], []>} : vector<40x16xbf16>, vector<16x24xbf16>, vector<40x24xf32> -> vector<40x24xf32>
    %40 = arith.addf %34, %39 : vector<40x24xf32>
    %c0_37 = arith.constant 0 : index
    %c17 = arith.constant 17 : index
    %c0_38 = arith.constant 0 : index
    %41 = vector.load %arg1[%c0_37, %c17, %c0_38] : memref<1x64x16xbf16, #tpu.memory_space<vmem>>, vector<1x40x16xbf16>
    %42 = vector.shape_cast %41 : vector<1x40x16xbf16> to vector<40x16xbf16>
    %c7 = arith.constant 7 : index
    %c0_39 = arith.constant 0 : index
    %c0_40 = arith.constant 0 : index
    %43 = vector.load %arg2[%c7, %c0_39, %c0_40] : memref<9x16x24xbf16, #tpu.memory_space<vmem>>, vector<1x16x24xbf16>
    %44 = vector.shape_cast %43 : vector<1x16x24xbf16> to vector<16x24xbf16>
    %cst_41 = arith.constant dense<0.000000e+00> : vector<40x24xf32>
    %45 = tpu.matmul %42, %44, %cst_41 {dimension_numbers = #tpu.dot_dimension_numbers<[1], [0], [0], [1], [0, 0, 1, 1], [], []>} : vector<40x16xbf16>, vector<16x24xbf16>, vector<40x24xf32> -> vector<40x24xf32>
    %46 = arith.addf %40, %45 : vector<40x24xf32>
    %c0_42 = arith.constant 0 : index
    %c18 = arith.constant 18 : index
    %c0_43 = arith.constant 0 : index
    %47 = vector.load %arg1[%c0_42, %c18, %c0_43] : memref<1x64x16xbf16, #tpu.memory_space<vmem>>, vector<1x40x16xbf16>
    %48 = vector.shape_cast %47 : vector<1x40x16xbf16> to vector<40x16xbf16>
    %c8_44 = arith.constant 8 : index
    %c0_45 = arith.constant 0 : index
    %c0_46 = arith.constant 0 : index
    %49 = vector.load %arg2[%c8_44, %c0_45, %c0_46] : memref<9x16x24xbf16, #tpu.memory_space<vmem>>, vector<1x16x24xbf16>
    %50 = vector.shape_cast %49 : vector<1x16x24xbf16> to vector<16x24xbf16>
    %cst_47 = arith.constant dense<0.000000e+00> : vector<40x24xf32>
    %51 = tpu.matmul %48, %50, %cst_47 {dimension_numbers = #tpu.dot_dimension_numbers<[1], [0], [0], [1], [0, 0, 1, 1], [], []>} : vector<40x16xbf16>, vector<16x24xbf16>, vector<40x24xf32> -> vector<40x24xf32>
    %52 = arith.addf %46, %51 : vector<40x24xf32>
    %c0_48 = arith.constant 0 : index
    %c0_49 = arith.constant 0 : index
    %53 = vector.load %arg3[%c0_48, %c0_49] : memref<1x24xf32, #tpu.memory_space<vmem>>, vector<1x24xf32>
    %54 = vector.broadcast %53 : vector<1x24xf32> to vector<40x24xf32>
    %55 = arith.addf %52, %54 : vector<40x24xf32>
    %c0_50 = arith.constant 0 : index
    %c0_51 = arith.constant 0 : index
    %c0_52 = arith.constant 0 : index
    %56 = vector.load %arg4[%c0_50, %c0_51, %c0_52] : memref<1x40x24xbf16, #tpu.memory_space<vmem>>, vector<1x40x24xbf16>
    %57 = vector.shape_cast %56 : vector<1x40x24xbf16> to vector<40x24xbf16>
    %58 = arith.extf %57 : vector<40x24xbf16> to vector<40x24xf32>
    %59 = arith.addf %55, %58 : vector<40x24xf32>
    %cst_53 = arith.constant 0.000000e+00 : f32
    %60 = vector.broadcast %cst_53 : f32 to vector<40x24xf32>
    %61 = arith.maximumf %59, %60 : vector<40x24xf32>
    %62 = arith.truncf %61 : vector<40x24xf32> to vector<40x24xbf16>
    %c0_54 = arith.constant 0 : index
    %c0_55 = arith.constant 0 : index
    %c0_56 = arith.constant 0 : index
    %63 = vector.load %arg5[%c0_54, %c0_55, %c0_56] : memref<1x40x24xbf16, #tpu.memory_space<vmem>>, vector<1x40x24xbf16>
    %64 = vector.shape_cast %63 : vector<1x40x24xbf16> to vector<40x24xbf16>
    %65 = vector.shape_cast %62 : vector<40x24xbf16> to vector<1x40x24xbf16>
    tpu.vector_store %arg5[%c0_54, %c0_55, %c0_56], %65 {strides = array<i32>} : memref<1x40x24xbf16, #tpu.memory_space<vmem>>, vector<1x40x24xbf16>,
    return
  }
  func.func @transform_0(%arg0: i32) -> (i32, i32, i32) {
    %c0_i32 = arith.constant 0 : i32
    %c0_i32_0 = arith.constant 0 : i32
    %c0_i32_1 = arith.constant 0 : i32
    return %arg0, %c0_i32, %c0_i32_0 : i32, i32, i32
  }
  func.func @transform_1(%arg0: i32) -> (i32, i32, i32) {
    %c0_i32 = arith.constant 0 : i32
    %c0_i32_0 = arith.constant 0 : i32
    %c0_i32_1 = arith.constant 0 : i32
    %c0_i32_2 = arith.constant 0 : i32
    return %c0_i32, %c0_i32_0, %c0_i32_1 : i32, i32, i32
  }
  func.func @transform_2(%arg0: i32) -> (i32, i32) {
    %c0_i32 = arith.constant 0 : i32
    %c0_i32_0 = arith.constant 0 : i32
    %c0_i32_1 = arith.constant 0 : i32
    return %c0_i32, %c0_i32_0 : i32, i32
  }
  func.func @transform_3(%arg0: i32) -> (i32, i32, i32) {
    %c0_i32 = arith.constant 0 : i32
    %c0_i32_0 = arith.constant 0 : i32
    %c0_i32_1 = arith.constant 0 : i32
    return %arg0, %c0_i32, %c0_i32_0 : i32, i32, i32
  }
  func.func @transform_4(%arg0: i32) -> (i32, i32, i32) {
    %c0_i32 = arith.constant 0 : i32
    %c0_i32_0 = arith.constant 0 : i32
    %c0_i32_1 = arith.constant 0 : i32
    return %arg0, %c0_i32, %c0_i32_0 : i32, i32, i32
  }
}

</mosaic_0001>

<llo_original>
// kernel: tpu_custom_call.1
$region0: #{tpu_custom_call.1}
  #allocation0 [shape = 'u32[]', space=smem, size = 0x4, offset = 0x4, fixed_abs, tag = 'smem constant byte address 0x4 - core index']
  #allocation1 [shape = 'u32[144,128]{1,0:T(1,128)}', space=vmem, size = 0x12000, scoped, tag = 'internal scratch']
  %s0 = inlined_call_operand.vmem [shape: bf16[2,64,16], index: 0, kind: input, shape index: {}]
  %s1 = inlined_call_operand.vmem [shape: bf16[9,16,24], index: 1, kind: input, shape index: {}]
  %s2 = inlined_call_operand.vmem [shape: f32[1,24], index: 2, kind: input, shape index: {}]
  %s3 = inlined_call_operand.vmem [shape: bf16[2,40,24], index: 3, kind: input, shape index: {}]
  %s4 = inlined_call_operand.vmem [shape: bf16[2,40,24], index: 4, kind: output, shape index: {}]
  %s5 = sld [smem:[#allocation0]]
  $region49: #{tpu_custom_call.1} parent=0
    _
  %s7 = ssub.s32 1, %s5
  %s8 = scalar_select 0, %s7, %s5
  loop: start=0, step=1, limit=4
  $region2: #{tpu_custom_call.1} parent=0 // loop_pre_header
    _
  $region3: #{tpu_custom_call.1} parent=0 // loop_header
    %s10 = sphi 0, %s14
    %p11 = scmp.ge.s32.totalorder %s10, 4
    %s20 = sphi 0, %s22
    %s23 = sphi 0, %s20
    %s24 = sphi 0, %s23
    %s40 = sphi 0, %s24
    %s44 = sphi 0, %s44
    %s46 = sphi 0, %s44
    %s47 = sphi 0, %s46
    %s61 = sphi 0, %s47
    %s65 = sphi 0, %s65
    %s67 = sphi 0, %s65
    %s68 = sphi 0, %s67
    %s82 = sphi 0, %s68
    %s88 = sphi 0, %s90
    %s91 = sphi 0, %s88
    %s92 = sphi 0, %s91
    %s108 = sphi 0, %s92
    %s114 = sphi 0, %s116
    %s117 = sphi 0, %s114
    %s118 = sphi 0, %s117
    %s134 = sphi 0, %s118
  $region4: #{tpu_custom_call.1} parent=0 // loop_header_branch
    %13 = sbr.rel (%p11) target = $region8
  $region5: #{tpu_custom_call.1} parent=0 // loop_body
    %s15 = ssub.s32 %s10, 1
    %s16 = ssub.s32 %s10, 2
    %s17 = sadd.s32 %s10, 1
    %s18 = ssub.s32 %s10, %s17
    %p19 = scmp.eq.s32.totalorder %s18, 0
    %s21 = sadd.s32 %s20, 1
    %s22 = scalar_select %p19, %s20, %s21
    %p25 = pneg %p19
    %p26 = scmp.eq.s32.totalorder %s10, 1
    %p27 = por %p25, %p26
    %p28 = scmp.ne.s32.totalorder %s20, %s23
    %p29 = scmp.eq.s32.totalorder %s10, 0
    %p30 = por %p28, %p29
    %p31 = scmp.ne.s32.totalorder %s20, %s23
    %p32 = scmp.eq.s32.totalorder %s15, 1
    %p33 = por %p31, %p32
    %p34 = scmp.ne.s32.totalorder %s23, %s24
    %p35 = scmp.eq.s32.totalorder %s15, 0
    %p36 = por %p34, %p35
    %p37 = scmp.ne.s32.totalorder %s23, %s24
    %p38 = scmp.eq.s32.totalorder %s16, 1
    %p39 = por %p37, %p38
    %p41 = scmp.ne.s32.totalorder %s24, %s40
    %p42 = scmp.eq.s32.totalorder %s16, 0
    %p43 = por %p41, %p42
    %s45 = sadd.s32 %s44, 1
    %p48 = scmp.eq.s32.totalorder %s10, 1
    %p49 = scmp.ne.s32.totalorder %s44, %s46
    %p50 = scmp.eq.s32.totalorder %s10, 0
    %p51 = por %p49, %p50
    %p52 = scmp.ne.s32.totalorder %s44, %s46
    %p53 = scmp.eq.s32.totalorder %s15, 1
    %p54 = por %p52, %p53
    %p55 = scmp.ne.s32.totalorder %s46, %s47
    %p56 = scmp.eq.s32.totalorder %s15, 0
    %p57 = por %p55, %p56
    %p58 = scmp.ne.s32.totalorder %s46, %s47
    %p59 = scmp.eq.s32.totalorder %s16, 1
    %p60 = por %p58, %p59
    %p62 = scmp.ne.s32.totalorder %s47, %s61
    %p63 = scmp.eq.s32.totalorder %s16, 0
    %p64 = por %p62, %p63
    %s66 = sadd.s32 %s65, 1
    %p69 = scmp.eq.s32.totalorder %s10, 1
    %p70 = scmp.ne.s32.totalorder %s65, %s67
    %p71 = scmp.eq.s32.totalorder %s10, 0
    %p72 = por %p70, %p71
    %p73 = scmp.ne.s32.totalorder %s65, %s67
    %p74 = scmp.eq.s32.totalorder %s15, 1
    %p75 = por %p73, %p74
    %p76 = scmp.ne.s32.totalorder %s67, %s68
    %p77 = scmp.eq.s32.totalorder %s15, 0
    %p78 = por %p76, %p77
    %p79 = scmp.ne.s32.totalorder %s67, %s68
    %p80 = scmp.eq.s32.totalorder %s16, 1
    %p81 = por %p79, %p80
    %p83 = scmp.ne.s32.totalorder %s68, %s82
    %p84 = scmp.eq.s32.totalorder %s16, 0
    %p85 = por %p83, %p84
    %s86 = ssub.s32 %s10, %s17
    %p87 = scmp.eq.s32.totalorder %s86, 0
    %s89 = sadd.s32 %s88, 1
    %s90 = scalar_select %p87, %s88, %s89
    %p93 = pneg %p87
    %p94 = scmp.eq.s32.totalorder %s10, 1
    %p95 = por %p93, %p94
    %p96 = scmp.ne.s32.totalorder %s88, %s91
    %p97 = scmp.eq.s32.totalorder %s10, 0
    %p98 = por %p96, %p97
    %p99 = scmp.ne.s32.totalorder %s88, %s91
    %p100 = scmp.eq.s32.totalorder %s15, 1
    %p101 = por %p99, %p100
    %p102 = scmp.ne.s32.totalorder %s91, %s92
    %p103 = scmp.eq.s32.totalorder %s15, 0
    %p104 = por %p102, %p103
    %p105 = scmp.ne.s32.totalorder %s91, %s92
    %p106 = scmp.eq.s32.totalorder %s16, 1
    %p107 = por %p105, %p106
    %p109 = scmp.ne.s32.totalorder %s92, %s108
    %p110 = scmp.eq.s32.totalorder %s16, 0
    %p111 = por %p109, %p110
    %s112 = ssub.s32 %s10, %s17
    %p113 = scmp.eq.s32.totalorder %s112, 0
    %s115 = sadd.s32 %s114, 1
    %s116 = scalar_select %p113, %s114, %s115
    %p119 = pneg %p113
    %p120 = scmp.eq.s32.totalorder %s10, 1
    %p121 = por %p119, %p120
    %p122 = scmp.ne.s32.totalorder %s114, %s117
    %p123 = scmp.eq.s32.totalorder %s10, 0
    %p124 = por %p122, %p123
    %p125 = scmp.ne.s32.totalorder %s114, %s117
    %p126 = scmp.eq.s32.totalorder %s15, 1
    %p127 = por %p125, %p126
    %p128 = scmp.ne.s32.totalorder %s117, %s118
    %p129 = scmp.eq.s32.totalorder %s15, 0
    %p130 = por %p128, %p129
    %p131 = scmp.ne.s32.totalorder %s117, %s118
    %p132 = scmp.eq.s32.totalorder %s16, 1
    %p133 = por %p131, %p132
    %p135 = scmp.ne.s32.totalorder %s118, %s134
    %p136 = scmp.eq.s32.totalorder %s16, 0
    %p137 = por %p135, %p136
    %p138 = scmp.le.s32.totalorder 1, %s10
    %p139 = scmp.lt.s32.totalorder %s10, 3
    %p140 = pnand %p138, %p139
    %p141 = pneg %p140
    // Predicated region
    $region9: #{tpu_custom_call.1} parent=5 // pred_check
      _
    $region10: #{tpu_custom_call.1} parent=5 // pred_check_branch
      %143 = sbr.rel (%p140) target = $region12
    $region11: #{tpu_custom_call.1} parent=5 // pred_region
      %s144 = ssub.s32 %s10, 1
      // Predicated region
      $region13: #{tpu_custom_call.1} parent=11 // pred_check
        %p145 = pneg %p57
      $region14: #{tpu_custom_call.1} parent=11 // pred_check_branch
        %147 = sbr.rel (%p145) target = $region16
      $region15: #{tpu_custom_call.1} parent=11 // pred_region
        _
      $region16: #{tpu_custom_call.1} parent=11 // pred_fallthru
        _
      // Predicated region
      $region17: #{tpu_custom_call.1} parent=11 // pred_check
        %p148 = pneg %p78
      $region18: #{tpu_custom_call.1} parent=11 // pred_check_branch
        %150 = sbr.rel (%p148) target = $region20
      $region19: #{tpu_custom_call.1} parent=11 // pred_region
        _
      $region20: #{tpu_custom_call.1} parent=11 // pred_fallthru
        _
    $region12: #{tpu_custom_call.1} parent=5 // pred_fallthru
      _
    %p151 = scmp.lt.s32.totalorder %s10, 2
    // Predicated region
    $region21: #{tpu_custom_call.1} parent=5 // pred_check
      %p152 = pneg %p151
    $region22: #{tpu_custom_call.1} parent=5 // pred_check_branch
      %154 = sbr.rel (%p152) target = $region24
    $region23: #{tpu_custom_call.1} parent=5 // pred_region
      // Predicated region
      $region25: #{tpu_custom_call.1} parent=23 // pred_check
        %p155 = pneg %p30
      $region26: #{tpu_custom_call.1} parent=23 // pred_check_branch
        %157 = sbr.rel (%p155) target = $region28
      $region27: #{tpu_custom_call.1} parent=23 // pred_region
        %p158 = scmp.lt.s32.totalorder %s10, 1
        %s159 = scalar_select %p158, %s10, 1
        %s160 = smul.addr %s159, 8
        %s161 = smul.addr %s160, 4
        %s162 = scalar_lea.vmem %s0, %s161
      $region28: #{tpu_custom_call.1} parent=23 // pred_fallthru
        _
      // Predicated region
      $region29: #{tpu_custom_call.1} parent=23 // pred_check
        %p163 = pneg %p98
      $region30: #{tpu_custom_call.1} parent=23 // pred_check_branch
        %165 = sbr.rel (%p163) target = $region32
      $region31: #{tpu_custom_call.1} parent=23 // pred_region
        %p166 = scmp.lt.s32.totalorder %s10, 1
        %s167 = scalar_select %p166, %s10, 1
        %s168 = smul.addr %s167, 5
        %s169 = smul.addr %s168, 4
        %s170 = scalar_lea.vmem %s3, %s169
      $region32: #{tpu_custom_call.1} parent=23 // pred_fallthru
        _
    $region24: #{tpu_custom_call.1} parent=5 // pred_fallthru
      _
    %p171 = scmp.le.s32.totalorder 1, %s10
    %p172 = scmp.lt.s32.totalorder %s10, 3
    %p173 = pnand %p171, %p172
    %p174 = pneg %p173
    // Predicated region
    $region33: #{tpu_custom_call.1} parent=5 // pred_check
      _
    $region34: #{tpu_custom_call.1} parent=5 // pred_check_branch
      %176 = sbr.rel (%p173) target = $region36
    $region35: #{tpu_custom_call.1} parent=5 // pred_region
      %s177 = ssub.s32 %s10, 1
      %p178 = scmp.lt.s32.totalorder %s15, 1
      %s179 = scalar_select %p178, %s15, 1
      %s180 = smul.addr %s179, 8
      %s181 = smul.addr %s180, 4
      %s182 = scalar_lea.vmem %s0, %s181
      %p183 = pneg %p36
      %p184 = pneg %p33
      %p185 = pneg %p57
      %p186 = pneg %p54
      %p187 = pneg %p78
      %p188 = pneg %p75
      %p189 = scmp.lt.s32.totalorder %s15, 1
      %s190 = scalar_select %p189, %s15, 1
      %s191 = smul.addr %s190, 5
      %s192 = smul.addr %s191, 4
      %s193 = scalar_lea.vmem %s3, %s192
      %p194 = pneg %p104
      %p195 = pneg %p101
      %p196 = pneg %p130
      %p197 = pneg %p127
      %p198 = scmp.lt.s32.totalorder %s15, 1
      %s199 = scalar_select %p198, %s15, 1
      %s200 = smul.addr %s199, 5
      %s201 = smul.addr %s200, 4
      %s202 = scalar_lea.vmem %s4, %s201
      %p203 = scmp.lt.s32.totalorder %s15, 1
      %s204 = scalar_select %p203, %s15, 1
      %s205 = smul.addr %s204, 8
      %s206 = smul.addr %s205, 4
      %s207 = scalar_lea.vmem %s0, %s206
      %p208 = scmp.lt.s32.totalorder %s15, 1
      %s209 = scalar_select %p208, %s15, 1
      %s210 = smul.addr %s209, 5
      %s211 = smul.addr %s210, 4
      %s212 = scalar_lea.vmem %s3, %s211
      %p213 = scmp.lt.s32.totalorder %s15, 1
      %s214 = scalar_select %p213, %s15, 1
      %s215 = smul.addr %s214, 5
      %s216 = smul.addr %s215, 4
      %s217 = scalar_lea.vmem %s4, %s216
      %v219 = vld [vmem:[%s207] sm:$0xf]
      %v220 = vld [vmem:[%s207 + $0x4] sm:$0xf]
      %v221 = vld [vmem:[%s207 + $0x8] sm:$0xf]
      %v222 = vld [vmem:[%s207 + $0xc] sm:$0xf]
      %v223 = vld [vmem:[%s207 + $0x10] sm:$0xf]
      %v224 = vld [vmem:[%s1] sm:$0xf]
      %v225 = vld [vmem:[%s1 + $0x4] sm:$0xf]
      %v226 = vld [vmem:[%s207 + $0x14] sm:$0x1]
      %s227 = scalar_lea.vmem %s1, 8
      %v228 = vld [vmem:[%s227] sm:$0xf]
      %v229 = vld [vmem:[%s227 + $0x4] sm:$0xf]
      %v236 = vunpack.c.l.b16 %v219
      %v237 = vunpack.c.l.b16 %v220
      %v238 = vunpack.c.l.b16 %v221
      %v239 = vunpack.c.l.b16 %v222
      %v240 = vunpack.c.l.b16 %v223
      %v241 = vunpack.c.l.b16 %v226
      %v242 = vpack.c.b16 %v237, %v236
      %v243 = vpack.c.b16 %v239, %v238
      %v244 = vpack.c.b16 %v241, %v240
      %vm245 = vsmask.f32 7424
      %v247 = vshrl.u32 %v242, 16
      %v249 = vshll.u32 %v242, 16
      %v251 = vrot.slane %v249, 1
      %v252 = vor.u32 %v247, %v251
      %v254 = vshll.u32 %v243, 16
      %v256 = vrot.slane %v254, 1
      %v257 = vsel %vm245, %v252, %v256
      %v258 = vshrl.u32 %v243, 16
      %v260 = vor.u32 %v258, %v256
      %v262 = vshll.u32 %v244, 16
      %v264 = vrot.slane %v262, 1
      %v265 = vsel %vm245, %v260, %v264
      %v266 = vshrl.u32 %v244, 16
      %v268 = vor.u32 %v266, %v264
      %v271 = vunpack.c.l.b16 %v228
      %v272 = vunpack.c.l.b16 %v229
      %v273 = vpack.c.b16 %v272, %v271
      %vm275 = vcmask 130048
      %v277 = vsel %vm275, %v257, 0
      %v280 = vsel %vm275, %v265, 0
      %v283 = vsel %vm275, %v268, 0
      %285 = vmatprep.subr.bf16.mxu0 0
      %286 = vmatpush1.bf16.msra.mxu0 %v273
      %287 = vmatprep.subr.bf16.mxu0 0
      %288 = vmatpush1.bf16.msra.mxu0 0
      %289 = vmatprep.subr.bf16.mxu0 0
      %290 = vmatpush1.bf16.msra.mxu0 0
      %291 = vmatprep.subr.bf16.mxu0 0
      %292 = vmatpush1.bf16.msra.mxu0 0
      %293 = vmatprep.subr.bf16.mxu0 0
      %294 = vmatpush1.bf16.msra.mxu0 0
      %295 = vmatprep.subr.bf16.mxu0 0
      %296 = vmatpush1.bf16.msra.mxu0 0
      %297 = vmatprep.subr.bf16.mxu0 0
      %298 = vmatpush1.bf16.msra.mxu0 0
      %299 = vmatprep.subr.bf16.mxu0 0
      %300 = vmatpush1.bf16.msra.mxu0 0
      %301 = vmatprep.subr.bf16.mxu0 0
      %302 = vmatpush1.bf16.msra.mxu0 0
      %303 = vmatprep.subr.bf16.mxu0 0
      %304 = vmatpush1.bf16.msra.mxu0 0
      %305 = vmatprep.subr.bf16.mxu0 0
      %306 = vmatpush1.bf16.msra.mxu0 0
      %307 = vmatprep.subr.bf16.mxu0 0
      %308 = vmatpush1.bf16.msra.mxu0 0
      %309 = vmatprep.subr.bf16.mxu0 0
      %310 = vmatpush1.bf16.msra.mxu0 0
      %311 = vmatprep.subr.bf16.mxu0 0
      %312 = vmatpush1.bf16.msra.mxu0 0
      %313 = vmatprep.subr.bf16.mxu0 0
      %314 = vmatpush1.bf16.msra.mxu0 0
      %315 = vmatprep.subr.bf16.mxu0 0
      %316 = vmatpush1.bf16.msra.mxu0 0
      %317 = vmatprep.mubr.bf16.mxu0 0
      %318 = vmatmul.mubr.bf16.gmra.mrb[0].mxu0 %v277
      %v319 = vpop.f32.mrb[0].mxu0
      %v320 = vadd.f32 0.0, %v319
      %v321 = vpop.f32.mrb[0].mxu0
      %v322 = vpop.f32.mrb[0].mxu0
      %v323 = vadd.f32 0.0, %v322
      %v324 = vpop.f32.mrb[0].mxu0
      %325 = vmatprep.mubr.bf16.mxu0 0
      %326 = vmatmul.mubr.bf16.gmra.mrb[0].mxu0 %v280
      %v327 = vpop.f32.mrb[0].mxu0
      %v328 = vadd.f32 0.0, %v327
      %v329 = vpop.f32.mrb[0].mxu0
      %v330 = vpop.f32.mrb[0].mxu0
      %v331 = vadd.f32 0.0, %v330
      %v332 = vpop.f32.mrb[0].mxu0
      %333 = vmatprep.mubr.bf16.mxu0 0
      %334 = vmatmul.mubr.bf16.gmra.mrb[0].mxu0 %v283
      %v335 = vpop.f32.mrb[0].mxu0
      %v336 = vadd.f32 0.0, %v335
      %v337 = vpop.f32.mrb[0].mxu0
      %v338 = vpop.f32.mrb[0].mxu0
      %v339 = vpop.f32.mrb[0].mxu0
      %340 = vdwg.mxu0
      %v341 = vpack.c.b16 %v240, %v240
      %v344 = vunpack.c.l.b16 %v224
      %v345 = vunpack.c.l.b16 %v225
      %v346 = vpack.c.b16 %v345, %v344
      %v348 = vsel %vm275, %v242, 0
      %v350 = vsel %vm275, %v243, 0
      %v353 = vsel %vm275, %v341, 0
      %355 = vmatprep.subr.bf16.mxu0 0
      %356 = vmatpush1.bf16.msra.mxu0 %v346
      %357 = vmatprep.subr.bf16.mxu0 0
      %358 = vmatpush1.bf16.msra.mxu0 0
      %359 = vmatprep.subr.bf16.mxu0 0
      %360 = vmatpush1.bf16.msra.mxu0 0
      %361 = vmatprep.subr.bf16.mxu0 0
      %362 = vmatpush1.bf16.msra.mxu0 0
      %363 = vmatprep.subr.bf16.mxu0 0
      %364 = vmatpush1.bf16.msra.mxu0 0
      %365 = vmatprep.subr.bf16.mxu0 0
      %366 = vmatpush1.bf16.msra.mxu0 0
      %367 = vmatprep.subr.bf16.mxu0 0
      %368 = vmatpush1.bf16.msra.mxu0 0
      %369 = vmatprep.subr.bf16.mxu0 0
      %370 = vmatpush1.bf16.msra.mxu0 0
      %371 = vmatprep.subr.bf16.mxu0 0
      %372 = vmatpush1.bf16.msra.mxu0 0
      %373 = vmatprep.subr.bf16.mxu0 0
      %374 = vmatpush1.bf16.msra.mxu0 0
      %375 = vmatprep.subr.bf16.mxu0 0
      %376 = vmatpush1.bf16.msra.mxu0 0
      %377 = vmatprep.subr.bf16.mxu0 0
      %378 = vmatpush1.bf16.msra.mxu0 0
      %379 = vmatprep.subr.bf16.mxu0 0
      %380 = vmatpush1.bf16.msra.mxu0 0
      %381 = vmatprep.subr.bf16.mxu0 0
      %382 = vmatpush1.bf16.msra.mxu0 0
      %383 = vmatprep.subr.bf16.mxu0 0
      %384 = vmatpush1.bf16.msra.mxu0 0
      %385 = vmatprep.subr.bf16.mxu0 0
      %386 = vmatpush1.bf16.msra.mxu0 0
      %387 = vmatprep.mubr.bf16.mxu0 0
      %388 = vmatmul.mubr.bf16.gmra.mrb[0].mxu0 %v348
      %v389 = vpop.f32.mrb[0].mxu0
      %v390 = vadd.f32 %v320, %v389
      %v391 = vpop.f32.mrb[0].mxu0
      %v392 = vpop.f32.mrb[0].mxu0
      %v393 = vadd.f32 %v323, %v392
      %v394 = vpop.f32.mrb[0].mxu0
      %395 = vmatprep.mubr.bf16.mxu0 0
      %396 = vmatmul.mubr.bf16.gmra.mrb[0].mxu0 %v350
      %v397 = vpop.f32.mrb[0].mxu0
      %v398 = vadd.f32 %v328, %v397
      %v399 = vpop.f32.mrb[0].mxu0
      %v400 = vpop.f32.mrb[0].mxu0
      %v401 = vadd.f32 %v331, %v400
      %v402 = vpop.f32.mrb[0].mxu0
      %403 = vmatprep.mubr.bf16.mxu0 0
      %404 = vmatmul.mubr.bf16.gmra.mrb[0].mxu0 %v353
      %v405 = vpop.f32.mrb[0].mxu0
      %v406 = vadd.f32 %v336, %v405
      %v407 = vpop.f32.mrb[0].mxu0
      %v408 = vpop.f32.mrb[0].mxu0
      %v409 = vpop.f32.mrb[0].mxu0
      %410 = vdwg.mxu0
      %v411 = vld [vmem:[%s207] sm:$0xe]
      %s412 = scalar_lea.vmem %s1, 16
      %v413 = vld [vmem:[%s412] sm:$0xf]
      %v414 = vld [vmem:[%s412 + $0x4] sm:$0xf]
      %v416 = vunpack.c.l.b16 %v411
      %v417 = vpack.c.b16 %v237, %v416
      %vm418 = vcmask 1046528
      %v419 = vrot.slane %v417, 1
      %v420 = vrot.slane %v243, 1
      %v421 = vsel %vm418, %v419, %v420
      %v422 = vrot.slane %v244, 1
      %v423 = vsel %vm418, %v420, %v422
      %v426 = vunpack.c.l.b16 %v413
      %v427 = vunpack.c.l.b16 %v414
      %v428 = vpack.c.b16 %v427, %v426
      %v431 = vsel %vm275, %v421, 0
      %v434 = vsel %vm275, %v423, 0
      %v437 = vsel %vm275, %v422, 0
      %439 = vmatprep.subr.bf16.mxu0 0
      %440 = vmatpush1.bf16.msra.mxu0 %v428
      %441 = vmatprep.subr.bf16.mxu0 0
      %442 = vmatpush1.bf16.msra.mxu0 0
      %443 = vmatprep.subr.bf16.mxu0 0
      %444 = vmatpush1.bf16.msra.mxu0 0
      %445 = vmatprep.subr.bf16.mxu0 0
      %446 = vmatpush1.bf16.msra.mxu0 0
      %447 = vmatprep.subr.bf16.mxu0 0
      %448 = vmatpush1.bf16.msra.mxu0 0
      %449 = vmatprep.subr.bf16.mxu0 0
      %450 = vmatpush1.bf16.msra.mxu0 0
      %451 = vmatprep.subr.bf16.mxu0 0
      %452 = vmatpush1.bf16.msra.mxu0 0
      %453 = vmatprep.subr.bf16.mxu0 0
      %454 = vmatpush1.bf16.msra.mxu0 0
      %455 = vmatprep.subr.bf16.mxu0 0
      %456 = vmatpush1.bf16.msra.mxu0 0
      %457 = vmatprep.subr.bf16.mxu0 0
      %458 = vmatpush1.bf16.msra.mxu0 0
      %459 = vmatprep.subr.bf16.mxu0 0
      %460 = vmatpush1.bf16.msra.mxu0 0
      %461 = vmatprep.subr.bf16.mxu0 0
      %462 = vmatpush1.bf16.msra.mxu0 0
      %463 = vmatprep.subr.bf16.mxu0 0
      %464 = vmatpush1.bf16.msra.mxu0 0
      %465 = vmatprep.subr.bf16.mxu0 0
      %466 = vmatpush1.bf16.msra.mxu0 0
      %467 = vmatprep.subr.bf16.mxu0 0
      %468 = vmatpush1.bf16.msra.mxu0 0
      %469 = vmatprep.subr.bf16.mxu0 0
      %470 = vmatpush1.bf16.msra.mxu0 0
      %471 = vmatprep.mubr.bf16.mxu0 0
      %472 = vmatmul.mubr.bf16.gmra.mrb[0].mxu0 %v431
      %v473 = vpop.f32.mrb[0].mxu0
      %v474 = vadd.f32 0.0, %v473
      %v475 = vpop.f32.mrb[0].mxu0
      %v476 = vpop.f32.mrb[0].mxu0
      %v477 = vadd.f32 0.0, %v476
      %v478 = vpop.f32.mrb[0].mxu0
      %479 = vmatprep.mubr.bf16.mxu0 0
      %480 = vmatmul.mubr.bf16.gmra.mrb[0].mxu0 %v434
      %v481 = vpop.f32.mrb[0].mxu0
      %v482 = vadd.f32 0.0, %v481
      %v483 = vpop.f32.mrb[0].mxu0
      %v484 = vpop.f32.mrb[0].mxu0
      %v485 = vadd.f32 0.0, %v484
      %v486 = vpop.f32.mrb[0].mxu0
      %487 = vmatprep.mubr.bf16.mxu0 0
      %488 = vmatmul.mubr.bf16.gmra.mrb[0].mxu0 %v437
      %v489 = vpop.f32.mrb[0].mxu0
      %v490 = vadd.f32 0.0, %v489
      %v491 = vpop.f32.mrb[0].mxu0
      %v492 = vpop.f32.mrb[0].mxu0
      %v493 = vpop.f32.mrb[0].mxu0
      %494 = vdwg.mxu0
      %v495 = vadd.f32 %v390, %v474
      %v496 = vadd.f32 %v393, %v477
      %v497 = vadd.f32 %v398, %v482
      %v498 = vadd.f32 %v401, %v485
      %v499 = vadd.f32 %v406, %v490
      %v500 = vld [vmem:[%s207 + $0x14] sm:$0xf]
      %s501 = scalar_lea.vmem %s1, 24
      %v502 = vld [vmem:[%s501] sm:$0xf]
      %v503 = vld [vmem:[%s501 + $0x4] sm:$0xf]
      %v505 = vunpack.c.l.b16 %v500
      %v506 = vpack.c.b16 %v238, %v237
      %v507 = vpack.c.b16 %v240, %v239
      %v508 = vpack.c.b16 %v505, %v505
      %v511 = vunpack.c.l.b16 %v502
      %v512 = vunpack.c.l.b16 %v503
      %v513 = vpack.c.b16 %v512, %v511
      %v516 = vsel %vm275, %v506, 0
      %v519 = vsel %vm275, %v507, 0
      %v522 = vsel %vm275, %v508, 0
      %524 = vmatprep.subr.bf16.mxu0 0
      %525 = vmatpush1.bf16.msra.mxu0 %v513
      %526 = vmatprep.subr.bf16.mxu0 0
      %527 = vmatpush1.bf16.msra.mxu0 0
      %528 = vmatprep.subr.bf16.mxu0 0
      %529 = vmatpush1.bf16.msra.mxu0 0
      %530 = vmatprep.subr.bf16.mxu0 0
      %531 = vmatpush1.bf16.msra.mxu0 0
      %532 = vmatprep.subr.bf16.mxu0 0
      %533 = vmatpush1.bf16.msra.mxu0 0
      %534 = vmatprep.subr.bf16.mxu0 0
      %535 = vmatpush1.bf16.msra.mxu0 0
      %536 = vmatprep.subr.bf16.mxu0 0
      %537 = vmatpush1.bf16.msra.mxu0 0
      %538 = vmatprep.subr.bf16.mxu0 0
      %539 = vmatpush1.bf16.msra.mxu0 0
      %540 = vmatprep.subr.bf16.mxu0 0
      %541 = vmatpush1.bf16.msra.mxu0 0
      %542 = vmatprep.subr.bf16.mxu0 0
      %543 = vmatpush1.bf16.msra.mxu0 0
      %544 = vmatprep.subr.bf16.mxu0 0
      %545 = vmatpush1.bf16.msra.mxu0 0
      %546 = vmatprep.subr.bf16.mxu0 0
      %547 = vmatpush1.bf16.msra.mxu0 0
      %548 = vmatprep.subr.bf16.mxu0 0
      %549 = vmatpush1.bf16.msra.mxu0 0
      %550 = vmatprep.subr.bf16.mxu0 0
      %551 = vmatpush1.bf16.msra.mxu0 0
      %552 = vmatprep.subr.bf16.mxu0 0
      %553 = vmatpush1.bf16.msra.mxu0 0
      %554 = vmatprep.subr.bf16.mxu0 0
      %555 = vmatpush1.bf16.msra.mxu0 0
      %556 = vmatprep.mubr.bf16.mxu0 0
      %557 = vmatmul.mubr.bf16.gmra.mrb[0].mxu0 %v516
      %v558 = vpop.f32.mrb[0].mxu0
      %v559 = vadd.f32 0.0, %v558
      %v560 = vpop.f32.mrb[0].mxu0
      %v561 = vpop.f32.mrb[0].mxu0
      %v562 = vadd.f32 0.0, %v561
      %v563 = vpop.f32.mrb[0].mxu0
      %564 = vmatprep.mubr.bf16.mxu0 0
      %565 = vmatmul.mubr.bf16.gmra.mrb[0].mxu0 %v519
      %v566 = vpop.f32.mrb[0].mxu0
      %v567 = vadd.f32 0.0, %v566
      %v568 = vpop.f32.mrb[0].mxu0
      %v569 = vpop.f32.mrb[0].mxu0
      %v570 = vadd.f32 0.0, %v569
      %v571 = vpop.f32.mrb[0].mxu0
      %572 = vmatprep.mubr.bf16.mxu0 0
      %573 = vmatmul.mubr.bf16.gmra.mrb[0].mxu0 %v522
      %v574 = vpop.f32.mrb[0].mxu0
      %v575 = vadd.f32 0.0, %v574
      %v576 = vpop.f32.mrb[0].mxu0
      %v577 = vpop.f32.mrb[0].mxu0
      %v578 = vpop.f32.mrb[0].mxu0
      %579 = vdwg.mxu0
      %v580 = vadd.f32 %v495, %v559
      %v581 = vadd.f32 %v496, %v562
      %v582 = vadd.f32 %v497, %v567
      %v583 = vadd.f32 %v498, %v570
      %v584 = vadd.f32 %v499, %v575
      %v585 = vld [vmem:[%s207 + $0x4] sm:$0xf]
      %v586 = vld [vmem:[%s207 + $0x8] sm:$0xf]
      %v587 = vld [vmem:[%s207 + $0xc] sm:$0xf]
      %v588 = vld [vmem:[%s207 + $0x10] sm:$0xf]
      %v589 = vld [vmem:[%s207 + $0x14] sm:$0xf]
      %v590 = vld [vmem:[%s207 + $0x18] sm:$0x1]
      %s591 = scalar_lea.vmem %s1, 32
      %v592 = vld [vmem:[%s591] sm:$0xf]
      %v593 = vld [vmem:[%s591 + $0x4] sm:$0xf]
      %v600 = vunpack.c.l.b16 %v585
      %v601 = vunpack.c.l.b16 %v586
      %v602 = vunpack.c.l.b16 %v587
      %v603 = vunpack.c.l.b16 %v588
      %v604 = vunpack.c.l.b16 %v589
      %v605 = vunpack.c.l.b16 %v590
      %v606 = vpack.c.b16 %v601, %v600
      %v607 = vpack.c.b16 %v603, %v602
      %v608 = vpack.c.b16 %v605, %v604
      %v610 = vshrl.u32 %v606, 16
      %v612 = vshll.u32 %v606, 16
      %v614 = vrot.slane %v612, 1
      %v615 = vor.u32 %v610, %v614
      %v617 = vshll.u32 %v607, 16
      %v619 = vrot.slane %v617, 1
      %v620 = vsel %vm245, %v615, %v619
      %v621 = vshrl.u32 %v607, 16
      %v623 = vor.u32 %v621, %v619
      %v625 = vshll.u32 %v608, 16
      %v627 = vrot.slane %v625, 1
      %v628 = vsel %vm245, %v623, %v627
      %v629 = vshrl.u32 %v608, 16
      %v631 = vor.u32 %v629, %v627
      %v634 = vunpack.c.l.b16 %v592
      %v635 = vunpack.c.l.b16 %v593
      %v636 = vpack.c.b16 %v635, %v634
      %v639 = vsel %vm275, %v620, 0
      %v642 = vsel %vm275, %v628, 0
      %v645 = vsel %vm275, %v631, 0
      %647 = vmatprep.subr.bf16.mxu0 0
      %648 = vmatpush1.bf16.msra.mxu0 %v636
      %649 = vmatprep.subr.bf16.mxu0 0
      %650 = vmatpush1.bf16.msra.mxu0 0
      %651 = vmatprep.subr.bf16.mxu0 0
      %652 = vmatpush1.bf16.msra.mxu0 0
      %653 = vmatprep.subr.bf16.mxu0 0
      %654 = vmatpush1.bf16.msra.mxu0 0
      %655 = vmatprep.subr.bf16.mxu0 0
      %656 = vmatpush1.bf16.msra.mxu0 0
      %657 = vmatprep.subr.bf16.mxu0 0
      %658 = vmatpush1.bf16.msra.mxu0 0
      %659 = vmatprep.subr.bf16.mxu0 0
      %660 = vmatpush1.bf16.msra.mxu0 0
      %661 = vmatprep.subr.bf16.mxu0 0
      %662 = vmatpush1.bf16.msra.mxu0 0
      %663 = vmatprep.subr.bf16.mxu0 0
      %664 = vmatpush1.bf16.msra.mxu0 0
      %665 = vmatprep.subr.bf16.mxu0 0
      %666 = vmatpush1.bf16.msra.mxu0 0
      %667 = vmatprep.subr.bf16.mxu0 0
      %668 = vmatpush1.bf16.msra.mxu0 0
      %669 = vmatprep.subr.bf16.mxu0 0
      %670 = vmatpush1.bf16.msra.mxu0 0
      %671 = vmatprep.subr.bf16.mxu0 0
      %672 = vmatpush1.bf16.msra.mxu0 0
      %673 = vmatprep.subr.bf16.mxu0 0
      %674 = vmatpush1.bf16.msra.mxu0 0
      %675 = vmatprep.subr.bf16.mxu0 0
      %676 = vmatpush1.bf16.msra.mxu0 0
      %677 = vmatprep.subr.bf16.mxu0 0
      %678 = vmatpush1.bf16.msra.mxu0 0
      %679 = vmatprep.mubr.bf16.mxu0 0
      %680 = vmatmul.mubr.bf16.gmra.mrb[0].mxu0 %v639
      %v681 = vpop.f32.mrb[0].mxu0
      %v682 = vadd.f32 0.0, %v681
      %v683 = vpop.f32.mrb[0].mxu0
      %v684 = vpop.f32.mrb[0].mxu0
      %v685 = vadd.f32 0.0, %v684
      %v686 = vpop.f32.mrb[0].mxu0
      %687 = vmatprep.mubr.bf16.mxu0 0
      %688 = vmatmul.mubr.bf16.gmra.mrb[0].mxu0 %v642
      %v689 = vpop.f32.mrb[0].mxu0
      %v690 = vadd.f32 0.0, %v689
      %v691 = vpop.f32.mrb[0].mxu0
      %v692 = vpop.f32.mrb[0].mxu0
      %v693 = vadd.f32 0.0, %v692
      %v694 = vpop.f32.mrb[0].mxu0
      %695 = vmatprep.mubr.bf16.mxu0 0
      %696 = vmatmul.mubr.bf16.gmra.mrb[0].mxu0 %v645
      %v697 = vpop.f32.mrb[0].mxu0
      %v698 = vadd.f32 0.0, %v697
      %v699 = vpop.f32.mrb[0].mxu0
      %v700 = vpop.f32.mrb[0].mxu0
      %v701 = vpop.f32.mrb[0].mxu0
      %702 = vdwg.mxu0
      %v703 = vadd.f32 %v580, %v682
      %v704 = vadd.f32 %v581, %v685
      %v705 = vadd.f32 %v582, %v690
      %v706 = vadd.f32 %v583, %v693
      %v707 = vadd.f32 %v584, %v698
      %v708 = vld [vmem:[%s207 + $0x4] sm:$0xe]
      %s709 = scalar_lea.vmem %s1, 40
      %v710 = vld [vmem:[%s709] sm:$0xf]
      %v711 = vld [vmem:[%s709 + $0x4] sm:$0xf]
      %v713 = vunpack.c.l.b16 %v708
      %v714 = vpack.c.b16 %v601, %v713
      %v715 = vrot.slane %v714, 1
      %v716 = vrot.slane %v607, 1
      %v717 = vsel %vm418, %v715, %v716
      %v718 = vrot.slane %v608, 1
      %v719 = vsel %vm418, %v716, %v718
      %v722 = vunpack.c.l.b16 %v710
      %v723 = vunpack.c.l.b16 %v711
      %v724 = vpack.c.b16 %v723, %v722
      %v727 = vsel %vm275, %v717, 0
      %v730 = vsel %vm275, %v719, 0
      %v733 = vsel %vm275, %v718, 0
      %735 = vmatprep.subr.bf16.mxu0 0
      %736 = vmatpush1.bf16.msra.mxu0 %v724
      %737 = vmatprep.subr.bf16.mxu0 0
      %738 = vmatpush1.bf16.msra.mxu0 0
      %739 = vmatprep.subr.bf16.mxu0 0
      %740 = vmatpush1.bf16.msra.mxu0 0
      %741 = vmatprep.subr.bf16.mxu0 0
      %742 = vmatpush1.bf16.msra.mxu0 0
      %743 = vmatprep.subr.bf16.mxu0 0
      %744 = vmatpush1.bf16.msra.mxu0 0
      %745 = vmatprep.subr.bf16.mxu0 0
      %746 = vmatpush1.bf16.msra.mxu0 0
      %747 = vmatprep.subr.bf16.mxu0 0
      %748 = vmatpush1.bf16.msra.mxu0 0
      %749 = vmatprep.subr.bf16.mxu0 0
      %750 = vmatpush1.bf16.msra.mxu0 0
      %751 = vmatprep.subr.bf16.mxu0 0
      %752 = vmatpush1.bf16.msra.mxu0 0
      %753 = vmatprep.subr.bf16.mxu0 0
      %754 = vmatpush1.bf16.msra.mxu0 0
      %755 = vmatprep.subr.bf16.mxu0 0
      %756 = vmatpush1.bf16.msra.mxu0 0
      %757 = vmatprep.subr.bf16.mxu0 0
      %758 = vmatpush1.bf16.msra.mxu0 0
      %759 = vmatprep.subr.bf16.mxu0 0
      %760 = vmatpush1.bf16.msra.mxu0 0
      %761 = vmatprep.subr.bf16.mxu0 0
      %762 = vmatpush1.bf16.msra.mxu0 0
      %763 = vmatprep.subr.bf16.mxu0 0
      %764 = vmatpush1.bf16.msra.mxu0 0
      %765 = vmatprep.subr.bf16.mxu0 0
      %766 = vmatpush1.bf16.msra.mxu0 0
      %767 = vmatprep.mubr.bf16.mxu0 0
      %768 = vmatmul.mubr.bf16.gmra.mrb[0].mxu0 %v727
      %v769 = vpop.f32.mrb[0].mxu0
      %v770 = vadd.f32 0.0, %v769
      %v771 = vpop.f32.mrb[0].mxu0
      %v772 = vpop.f32.mrb[0].mxu0
      %v773 = vadd.f32 0.0, %v772
      %v774 = vpop.f32.mrb[0].mxu0
      %775 = vmatprep.mubr.bf16.mxu0 0
      %776 = vmatmul.mubr.bf16.gmra.mrb[0].mxu0 %v730
      %v777 = vpop.f32.mrb[0].mxu0
      %v778 = vadd.f32 0.0, %v777
      %v779 = vpop.f32.mrb[0].mxu0
      %v780 = vpop.f32.mrb[0].mxu0
      %v781 = vadd.f32 0.0, %v780
      %v782 = vpop.f32.mrb[0].mxu0
      %783 = vmatprep.mubr.bf16.mxu0 0
      %784 = vmatmul.mubr.bf16.gmra.mrb[0].mxu0 %v733
      %v785 = vpop.f32.mrb[0].mxu0
      %v786 = vadd.f32 0.0, %v785
      %v787 = vpop.f32.mrb[0].mxu0
      %v788 = vpop.f32.mrb[0].mxu0
      %v789 = vpop.f32.mrb[0].mxu0
      %790 = vdwg.mxu0
      %v791 = vadd.f32 %v703, %v770
      %v792 = vadd.f32 %v704, %v773
      %v793 = vadd.f32 %v705, %v778
      %v794 = vadd.f32 %v706, %v781
      %v795 = vadd.f32 %v707, %v786
      %v796 = vld [vmem:[%s207 + $0x18] sm:$0xf]
      %s797 = scalar_lea.vmem %s1, 48
      %v798 = vld [vmem:[%s797] sm:$0xf]
      %v799 = vld [vmem:[%s797 + $0x4] sm:$0xf]
      %v801 = vunpack.c.l.b16 %v796
      %v802 = vpack.c.b16 %v602, %v601
      %v803 = vpack.c.b16 %v604, %v603
      %v804 = vpack.c.b16 %v801, %v801
      %v807 = vunpack.c.l.b16 %v798
      %v808 = vunpack.c.l.b16 %v799
      %v809 = vpack.c.b16 %v808, %v807
      %v812 = vsel %vm275, %v802, 0
      %v815 = vsel %vm275, %v803, 0
      %v818 = vsel %vm275, %v804, 0
      %820 = vmatprep.subr.bf16.mxu0 0
      %821 = vmatpush1.bf16.msra.mxu0 %v809
      %822 = vmatprep.subr.bf16.mxu0 0
      %823 = vmatpush1.bf16.msra.mxu0 0
      %824 = vmatprep.subr.bf16.mxu0 0
      %825 = vmatpush1.bf16.msra.mxu0 0
      %826 = vmatprep.subr.bf16.mxu0 0
      %827 = vmatpush1.bf16.msra.mxu0 0
      %828 = vmatprep.subr.bf16.mxu0 0
      %829 = vmatpush1.bf16.msra.mxu0 0
      %830 = vmatprep.subr.bf16.mxu0 0
      %831 = vmatpush1.bf16.msra.mxu0 0
      %832 = vmatprep.subr.bf16.mxu0 0
      %833 = vmatpush1.bf16.msra.mxu0 0
      %834 = vmatprep.subr.bf16.mxu0 0
      %835 = vmatpush1.bf16.msra.mxu0 0
      %836 = vmatprep.subr.bf16.mxu0 0
      %837 = vmatpush1.bf16.msra.mxu0 0
      %838 = vmatprep.subr.bf16.mxu0 0
      %839 = vmatpush1.bf16.msra.mxu0 0
      %840 = vmatprep.subr.bf16.mxu0 0
      %841 = vmatpush1.bf16.msra.mxu0 0
      %842 = vmatprep.subr.bf16.mxu0 0
      %843 = vmatpush1.bf16.msra.mxu0 0
      %844 = vmatprep.subr.bf16.mxu0 0
      %845 = vmatpush1.bf16.msra.mxu0 0
      %846 = vmatprep.subr.bf16.mxu0 0
      %847 = vmatpush1.bf16.msra.mxu0 0
      %848 = vmatprep.subr.bf16.mxu0 0
      %849 = vmatpush1.bf16.msra.mxu0 0
      %850 = vmatprep.subr.bf16.mxu0 0
      %851 = vmatpush1.bf16.msra.mxu0 0
      %852 = vmatprep.mubr.bf16.mxu0 0
      %853 = vmatmul.mubr.bf16.gmra.mrb[0].mxu0 %v812
      %v854 = vpop.f32.mrb[0].mxu0
      %v855 = vadd.f32 0.0, %v854
      %v856 = vpop.f32.mrb[0].mxu0
      %v857 = vpop.f32.mrb[0].mxu0
      %v858 = vadd.f32 0.0, %v857
      %v859 = vpop.f32.mrb[0].mxu0
      %860 = vmatprep.mubr.bf16.mxu0 0
      %861 = vmatmul.mubr.bf16.gmra.mrb[0].mxu0 %v815
      %v862 = vpop.f32.mrb[0].mxu0
      %v863 = vadd.f32 0.0, %v862
      %v864 = vpop.f32.mrb[0].mxu0
      %v865 = vpop.f32.mrb[0].mxu0
      %v866 = vadd.f32 0.0, %v865
      %v867 = vpop.f32.mrb[0].mxu0
      %868 = vmatprep.mubr.bf16.mxu0 0
      %869 = vmatmul.mubr.bf16.gmra.mrb[0].mxu0 %v818
      %v870 = vpop.f32.mrb[0].mxu0
      %v871 = vadd.f32 0.0, %v870
      %v872 = vpop.f32.mrb[0].mxu0
      %v873 = vpop.f32.mrb[0].mxu0
      %v874 = vpop.f32.mrb[0].mxu0
      %875 = vdwg.mxu0
      %v876 = vadd.f32 %v791, %v855
      %v877 = vadd.f32 %v792, %v858
      %v878 = vadd.f32 %v793, %v863
      %v879 = vadd.f32 %v794, %v866
      %v880 = vadd.f32 %v795, %v871
      %v881 = vld [vmem:[%s207 + $0x8] sm:$0xf]
      %v882 = vld [vmem:[%s207 + $0xc] sm:$0xf]
      %v883 = vld [vmem:[%s207 + $0x10] sm:$0xf]
      %v884 = vld [vmem:[%s207 + $0x14] sm:$0xf]
      %v885 = vld [vmem:[%s207 + $0x18] sm:$0xf]
      %v886 = vld [vmem:[%s207 + $0x1c] sm:$0x1]
      %s887 = scalar_lea.vmem %s1, 56
      %v888 = vld [vmem:[%s887] sm:$0xf]
      %v889 = vld [vmem:[%s887 + $0x4] sm:$0xf]
      %v896 = vunpack.c.l.b16 %v881
      %v897 = vunpack.c.l.b16 %v882
      %v898 = vunpack.c.l.b16 %v883
      %v899 = vunpack.c.l.b16 %v884
      %v900 = vunpack.c.l.b16 %v885
      %v901 = vunpack.c.l.b16 %v886
      %v902 = vpack.c.b16 %v897, %v896
      %v903 = vpack.c.b16 %v899, %v898
      %v904 = vpack.c.b16 %v901, %v900
      %v906 = vshrl.u32 %v902, 16
      %v908 = vshll.u32 %v902, 16
      %v910 = vrot.slane %v908, 1
      %v911 = vor.u32 %v906, %v910
      %v913 = vshll.u32 %v903, 16
      %v915 = vrot.slane %v913, 1
      %v916 = vsel %vm245, %v911, %v915
      %v917 = vshrl.u32 %v903, 16
      %v919 = vor.u32 %v917, %v915
      %v921 = vshll.u32 %v904, 16
      %v923 = vrot.slane %v921, 1
      %v924 = vsel %vm245, %v919, %v923
      %v925 = vshrl.u32 %v904, 16
      %v927 = vor.u32 %v925, %v923
      %v930 = vunpack.c.l.b16 %v888
      %v931 = vunpack.c.l.b16 %v889
      %v932 = vpack.c.b16 %v931, %v930
      %v935 = vsel %vm275, %v916, 0
      %v938 = vsel %vm275, %v924, 0
      %v941 = vsel %vm275, %v927, 0
      %943 = vmatprep.subr.bf16.mxu0 0
      %944 = vmatpush1.bf16.msra.mxu0 %v932
      %945 = vmatprep.subr.bf16.mxu0 0
      %946 = vmatpush1.bf16.msra.mxu0 0
      %947 = vmatprep.subr.bf16.mxu0 0
      %948 = vmatpush1.bf16.msra.mxu0 0
      %949 = vmatprep.subr.bf16.mxu0 0
      %950 = vmatpush1.bf16.msra.mxu0 0
      %951 = vmatprep.subr.bf16.mxu0 0
      %952 = vmatpush1.bf16.msra.mxu0 0
      %953 = vmatprep.subr.bf16.mxu0 0
      %954 = vmatpush1.bf16.msra.mxu0 0
      %955 = vmatprep.subr.bf16.mxu0 0
      %956 = vmatpush1.bf16.msra.mxu0 0
      %957 = vmatprep.subr.bf16.mxu0 0
      %958 = vmatpush1.bf16.msra.mxu0 0
      %959 = vmatprep.subr.bf16.mxu0 0
      %960 = vmatpush1.bf16.msra.mxu0 0
      %961 = vmatprep.subr.bf16.mxu0 0
      %962 = vmatpush1.bf16.msra.mxu0 0
      %963 = vmatprep.subr.bf16.mxu0 0
      %964 = vmatpush1.bf16.msra.mxu0 0
      %965 = vmatprep.subr.bf16.mxu0 0
      %966 = vmatpush1.bf16.msra.mxu0 0
      %967 = vmatprep.subr.bf16.mxu0 0
      %968 = vmatpush1.bf16.msra.mxu0 0
      %969 = vmatprep.subr.bf16.mxu0 0
      %970 = vmatpush1.bf16.msra.mxu0 0
      %971 = vmatprep.subr.bf16.mxu0 0
      %972 = vmatpush1.bf16.msra.mxu0 0
      %973 = vmatprep.subr.bf16.mxu0 0
      %974 = vmatpush1.bf16.msra.mxu0 0
      %975 = vmatprep.mubr.bf16.mxu0 0
      %976 = vmatmul.mubr.bf16.gmra.mrb[0].mxu0 %v935
      %v977 = vpop.f32.mrb[0].mxu0
      %v978 = vadd.f32 0.0, %v977
      %v979 = vpop.f32.mrb[0].mxu0
      %v980 = vpop.f32.mrb[0].mxu0
      %v981 = vadd.f32 0.0, %v980
      %v982 = vpop.f32.mrb[0].mxu0
      %983 = vmatprep.mubr.bf16.mxu0 0
      %984 = vmatmul.mubr.bf16.gmra.mrb[0].mxu0 %v938
      %v985 = vpop.f32.mrb[0].mxu0
      %v986 = vadd.f32 0.0, %v985
      %v987 = vpop.f32.mrb[0].mxu0
      %v988 = vpop.f32.mrb[0].mxu0
      %v989 = vadd.f32 0.0, %v988
      %v990 = vpop.f32.mrb[0].mxu0
      %991 = vmatprep.mubr.bf16.mxu0 0
      %992 = vmatmul.mubr.bf16.gmra.mrb[0].mxu0 %v941
      %v993 = vpop.f32.mrb[0].mxu0
      %v994 = vadd.f32 0.0, %v993
      %v995 = vpop.f32.mrb[0].mxu0
      %v996 = vpop.f32.mrb[0].mxu0
      %v997 = vpop.f32.mrb[0].mxu0
      %998 = vdwg.mxu0
      %v999 = vadd.f32 %v876, %v978
      %v1000 = vadd.f32 %v877, %v981
      %v1001 = vadd.f32 %v878, %v986
      %v1002 = vadd.f32 %v879, %v989
      %v1003 = vadd.f32 %v880, %v994
      %v1004 = vld [vmem:[%s207 + $0x8] sm:$0xe]
      %s1005 = scalar_lea.vmem %s1, 64
      %v1006 = vld [vmem:[%s1005] sm:$0xf]
      %v1007 = vld [vmem:[%s1005 + $0x4] sm:$0xf]
      %v1009 = vunpack.c.l.b16 %v1004
      %v1010 = vpack.c.b16 %v897, %v1009
      %v1011 = vrot.slane %v1010, 1
      %v1012 = vrot.slane %v903, 1
      %v1013 = vsel %vm418, %v1011, %v1012
      %v1014 = vrot.slane %v904, 1
      %v1015 = vsel %vm418, %v1012, %v1014
      %v1018 = vunpack.c.l.b16 %v1006
      %v1019 = vunpack.c.l.b16 %v1007
      %v1020 = vpack.c.b16 %v1019, %v1018
      %v1023 = vsel %vm275, %v1013, 0
      %v1026 = vsel %vm275, %v1015, 0
      %v1029 = vsel %vm275, %v1014, 0
      %1031 = vmatprep.subr.bf16.mxu0 0
      %1032 = vmatpush1.bf16.msra.mxu0 %v1020
      %1033 = vmatprep.subr.bf16.mxu0 0
      %1034 = vmatpush1.bf16.msra.mxu0 0
      %1035 = vmatprep.subr.bf16.mxu0 0
      %1036 = vmatpush1.bf16.msra.mxu0 0
      %1037 = vmatprep.subr.bf16.mxu0 0
      %1038 = vmatpush1.bf16.msra.mxu0 0
      %1039 = vmatprep.subr.bf16.mxu0 0
      %1040 = vmatpush1.bf16.msra.mxu0 0
      %1041 = vmatprep.subr.bf16.mxu0 0
      %1042 = vmatpush1.bf16.msra.mxu0 0
      %1043 = vmatprep.subr.bf16.mxu0 0
      %1044 = vmatpush1.bf16.msra.mxu0 0
      %1045 = vmatprep.subr.bf16.mxu0 0
      %1046 = vmatpush1.bf16.msra.mxu0 0
      %1047 = vmatprep.subr.bf16.mxu0 0
      %1048 = vmatpush1.bf16.msra.mxu0 0
      %1049 = vmatprep.subr.bf16.mxu0 0
      %1050 = vmatpush1.bf16.msra.mxu0 0
      %1051 = vmatprep.subr.bf16.mxu0 0
      %1052 = vmatpush1.bf16.msra.mxu0 0
      %1053 = vmatprep.subr.bf16.mxu0 0
      %1054 = vmatpush1.bf16.msra.mxu0 0
      %1055 = vmatprep.subr.bf16.mxu0 0
      %1056 = vmatpush1.bf16.msra.mxu0 0
      %1057 = vmatprep.subr.bf16.mxu0 0
      %1058 = vmatpush1.bf16.msra.mxu0 0
      %1059 = vmatprep.subr.bf16.mxu0 0
      %1060 = vmatpush1.bf16.msra.mxu0 0
      %1061 = vmatprep.subr.bf16.mxu0 0
      %1062 = vmatpush1.bf16.msra.mxu0 0
      %1063 = vmatprep.mubr.bf16.mxu0 0
      %1064 = vmatmul.mubr.bf16.gmra.mrb[0].mxu0 %v1023
      %v1065 = vpop.f32.mrb[0].mxu0
      %v1066 = vadd.f32 0.0, %v1065
      %v1067 = vpop.f32.mrb[0].mxu0
      %v1068 = vpop.f32.mrb[0].mxu0
      %v1069 = vadd.f32 0.0, %v1068
      %v1070 = vpop.f32.mrb[0].mxu0
      %1071 = vmatprep.mubr.bf16.mxu0 0
      %1072 = vmatmul.mubr.bf16.gmra.mrb[0].mxu0 %v1026
      %v1073 = vpop.f32.mrb[0].mxu0
      %v1074 = vadd.f32 0.0, %v1073
      %v1075 = vpop.f32.mrb[0].mxu0
      %v1076 = vpop.f32.mrb[0].mxu0
      %v1077 = vadd.f32 0.0, %v1076
      %v1078 = vpop.f32.mrb[0].mxu0
      %1079 = vmatprep.mubr.bf16.mxu0 0
      %1080 = vmatmul.mubr.bf16.gmra.mrb[0].mxu0 %v1029
      %v1081 = vpop.f32.mrb[0].mxu0
      %v1082 = vadd.f32 0.0, %v1081
      %v1083 = vpop.f32.mrb[0].mxu0
      %v1084 = vpop.f32.mrb[0].mxu0
      %v1085 = vpop.f32.mrb[0].mxu0
      %1086 = vdwg.mxu0
      %v1087 = vadd.f32 %v999, %v1066
      %v1088 = vadd.f32 %v1000, %v1069
      %v1089 = vadd.f32 %v1001, %v1074
      %v1090 = vadd.f32 %v1002, %v1077
      %v1091 = vadd.f32 %v1003, %v1082
      %v1092 = vld [vmem:[%s2] sm:$0x1]
      %v1094 = vlaneseq
      %v1095 = vshrl.u32 %v1094, 7
      %v1096 = vsub.s32 0, %v1095
      %v1097 = vrot.slane %v1092, %v1096
      %v1099 = vadd.f32 %v1087, %v1097
      %v1100 = vadd.f32 %v1088, %v1097
      %v1101 = vadd.f32 %v1089, %v1097
      %v1102 = vadd.f32 %v1090, %v1097
      %v1103 = vadd.f32 %v1091, %v1097
      %v1104 = vld [vmem:[%s212] sm:$0xf]
      %v1105 = vld [vmem:[%s212 + $0x4] sm:$0xf]
      %v1106 = vld [vmem:[%s212 + $0x8] sm:$0xf]
      %v1107 = vld [vmem:[%s212 + $0xc] sm:$0xf]
      %v1108 = vld [vmem:[%s212 + $0x10] sm:$0xf]
      %v1109 = vunpack.c.l.bf16 %v1104
      %v1110 = vunpack.c.l.bf16 %v1105
      %v1111 = vunpack.c.l.bf16 %v1106
      %v1112 = vunpack.c.l.bf16 %v1107
      %v1113 = vunpack.c.l.bf16 %v1108
      %v1114 = vadd.f32 %v1099, %v1109
      %v1115 = vadd.f32 %v1100, %v1110
      %v1116 = vadd.f32 %v1101, %v1111
      %v1117 = vadd.f32 %v1102, %v1112
      %v1118 = vadd.f32 %v1103, %v1113
      %v1119 = vmax.f32 %v1114, 0.0
      %v1120 = vmax.f32 %v1115, 0.0
      %v1121 = vmax.f32 %v1116, 0.0
      %v1122 = vmax.f32 %v1117, 0.0
      %v1123 = vmax.f32 %v1118, 0.0
      %v1124 = vpack.c.bf16 %v1120, %v1119
      %v1125 = vpack.c.bf16 %v1122, %v1121
      %v1126 = vpack.c.bf16 %v1123, %v1123
      %v1130 = vunpack.c.l.b16 %v1124
      %v1131 = vunpack.c.h.b16 %v1124
      %v1132 = vunpack.c.l.b16 %v1125
      %v1133 = vunpack.c.h.b16 %v1125
      %v1134 = vunpack.c.l.b16 %v1126
      %v1135 = vpack.c.b16 %v1130, %v1130
      %v1136 = vpack.c.b16 %v1131, %v1131
      %v1137 = vpack.c.b16 %v1132, %v1132
      %v1138 = vpack.c.b16 %v1133, %v1133
      %v1139 = vpack.c.b16 %v1134, %v1134
      %vm1145 = vcmask 191488
      %1146 = vst.msk [vmem:[%s217] sm:$0xf] %vm1145, %v1135
      %1147 = vst.msk [vmem:[%s217 + $0x4] sm:$0xf] %vm1145, %v1136
      %1148 = vst.msk [vmem:[%s217 + $0x8] sm:$0xf] %vm1145, %v1137
      %1149 = vst.msk [vmem:[%s217 + $0xc] sm:$0xf] %vm1145, %v1138
      %1150 = vst.msk [vmem:[%s217 + $0x10] sm:$0xf] %vm1145, %v1139
      %p1151 = scmp.lt.s32.totalorder %s15, 1
      %s1152 = scalar_select %p1151, %s15, 1
      %s1153 = smul.addr %s1152, 5
      %s1154 = smul.addr %s1153, 4
      %s1155 = scalar_lea.vmem %s4, %s1154
      // Predicated region
      $region37: #{tpu_custom_call.1} parent=35 // pred_check
        %p1156 = pneg %p127
      $region38: #{tpu_custom_call.1} parent=35 // pred_check_branch
        %1158 = sbr.rel (%p1156) target = $region40
      $region39: #{tpu_custom_call.1} parent=35 // pred_region
        _
      $region40: #{tpu_custom_call.1} parent=35 // pred_fallthru
        _
    $region36: #{tpu_custom_call.1} parent=5 // pred_fallthru
      _
    %p1159 = scmp.le.s32.totalorder 2, %s10
    // Predicated region
    $region41: #{tpu_custom_call.1} parent=5 // pred_check
      %p1160 = pneg %p1159
    $region42: #{tpu_custom_call.1} parent=5 // pred_check_branch
      %1162 = sbr.rel (%p1160) target = $region44
    $region43: #{tpu_custom_call.1} parent=5 // pred_region
      %s1163 = ssub.s32 %s10, 2
      // Predicated region
      $region45: #{tpu_custom_call.1} parent=43 // pred_check
        %p1164 = pneg %p133
      $region46: #{tpu_custom_call.1} parent=43 // pred_check_branch
        %1166 = sbr.rel (%p1164) target = $region48
      $region47: #{tpu_custom_call.1} parent=43 // pred_region
        %p1167 = scmp.lt.s32.totalorder %s16, 1
        %s1168 = scalar_select %p1167, %s16, 1
        %s1169 = smul.addr %s1168, 5
        %s1170 = smul.addr %s1169, 4
        %s1171 = scalar_lea.vmem %s4, %s1170
      $region48: #{tpu_custom_call.1} parent=43 // pred_fallthru
        _
    $region44: #{tpu_custom_call.1} parent=5 // pred_fallthru
      _
  $region6: #{tpu_custom_call.1} parent=0 // loop_footer
    %s14 = sadd.s32 1, %s10
  $region7: #{tpu_custom_call.1} parent=0 // loop_footer_branch
    %9 = sbr.rel target = $region3
  $region8: #{tpu_custom_call.1} parent=0 // loop_exit
    _

</llo_original>
